<compile_context>
chip_gen: v7x
topology: tpu7x:2x2x1
jax: 0.10.0
libtpu: 0.0.40
codegen_flags: <defaults>
</compile_context>

<pallas_src>
import functools

import jax
import jax.numpy as jnp
from jax import lax
from jax.experimental import pallas as pl
from jax.experimental.pallas import tpu as pltpu

NUM_EMBEDDINGS = 128
MAX_REL = 32
NUM_CLASSES = 2 * MAX_REL + 1          # 65
_LANE = 128
_CHUNK_ROWS = 8 * _LANE                # 1024 rows per in-kernel chunk (one (8,128) offset tile)
_TM_MAX = 8192                         # rows per grid step (amortizes ~0.35 us/step overhead)


def _pos_enc_kernel(off_ref, w_ref, out_ref, *, max_rel):
    # off_ref: (tm//128, 128) int32, lane-dense; flat row index = lane_row*128 + lane
    # w_ref:   (c_pad, E) f32, bias folded in, resident across grid steps
    # out_ref: (tm, E) f32
    tm = out_ref.shape[0]
    c_pad = w_ref.shape[0]
    n_chunks = tm // _CHUNK_ROWS            # wrapper guarantees tm % _CHUNK_ROWS == 0
    sub_rows = _CHUNK_ROWS // _LANE         # 8 lane-rows per chunk

    # Hoisted iota (class index along lanes); JAX does not CSE broadcasts.
    lane_classes = lax.broadcasted_iota(jnp.int32, (_LANE, c_pad), 1)

    def chunk(j, carry):
        lr0 = pl.multiple_of(j * sub_rows, sub_rows)
        off = off_ref[pl.ds(lr0, sub_rows), :]                    # (8, 128) int32
        d = jnp.clip(off + max_rel, 0, 2 * max_rel)               # in [0, 2*max_rel]
        d_t = jnp.transpose(d)                                    # (128, 8): lane->sublane pivot
        row0 = pl.multiple_of(j * _CHUNK_ROWS, _CHUNK_ROWS)
        # Four 256-row MXU pushes per chunk: (256, c_pad) x (c_pad, E).
        for a in range(0, sub_rows, 2):
            onehot = jnp.concatenate(
                [(lane_classes == d_t[:, a:a + 1]).astype(jnp.float32),
                 (lane_classes == d_t[:, a + 1:a + 2]).astype(jnp.float32)],
                axis=0)                                           # (256, c_pad) f32
            out_ref[pl.ds(row0 + a * _LANE, 2 * _LANE), :] = jnp.dot(
                onehot, w_ref[...], preferred_element_type=jnp.float32)
        return carry

    lax.fori_loop(0, n_chunks, chunk, 0, unroll=True)


def positional_encodings(offset, weight, bias, mask=None):
    """Pallas TPU equivalent of PositionalEncodings.forward.

    offset: int array of any shape (...,); weight: (num_embeddings, 2*max_rel+1);
    bias: (num_embeddings,). Returns float32 (..., num_embeddings).
    `mask` is accepted for API parity but unused (matches the PyTorch forward).
    """
    del mask
    num_embeddings, num_classes = weight.shape
    max_rel = (num_classes - 1) // 2
    c_pad = pl.cdiv(num_classes, _LANE) * _LANE

    orig_shape = offset.shape
    off_flat = offset.reshape(-1).astype(jnp.int32)
    n = off_flat.shape[0]

    # Lane-dense offset layout: pad to a whole number of (8,128) tiles. The pad
    # is at most 1023 int32 (~4 KiB) -- negligible vs the (n, 128) f32 output.
    n_pad = pl.cdiv(n, _CHUNK_ROWS) * _CHUNK_ROWS
    if n_pad != n:
        off_flat = jnp.pad(off_flat, (0, n_pad - n))
    off_rows = off_flat.reshape(n_pad // _LANE, _LANE)

    # Rows per grid step: multiple of the in-kernel chunk, capped at _TM_MAX.
    tm = min(_TM_MAX, n_pad)
    # Since tm % _CHUNK_ROWS == 0 and n_pad = cdiv(n, _CHUNK_ROWS)*_CHUNK_ROWS,
    # cdiv(n, tm) == cdiv(n_pad, tm): every block start is in-bounds; ragged
    # tails (input reads / output writes) are handled by clip + writeback drop.
    grid = pl.cdiv(n, tm)

    # Bias folded into transposed, class-padded weight. Rows >= num_classes are
    # never selected (clip keeps d <= 2*max_rel), so zeros there are fine.
    # (If called repeatedly with the same params, fold once outside / under jit.)
    w_t = jnp.zeros((c_pad, num_embeddings), jnp.float32)
    w_t = w_t.at[:num_classes, :].set(
        weight.T.astype(jnp.float32) + bias.astype(jnp.float32)[None, :])

    out = pl.pallas_call(
        functools.partial(_pos_enc_kernel, max_rel=max_rel),
        out_shape=jax.ShapeDtypeStruct((n, num_embeddings), jnp.float32),
        grid_spec=pl.GridSpec(
            grid=(grid,),
            in_specs=[
                pl.BlockSpec((tm // _LANE, _LANE), lambda i: (i, 0)),
                # Constant index_map: the weight stays resident across steps.
                pl.BlockSpec((c_pad, num_embeddings), lambda i: (0, 0)),
            ],
            out_specs=pl.BlockSpec((tm, num_embeddings), lambda i: (i, 0)),
        ),
        compiler_params=pltpu.CompilerParams(
            dimension_semantics=("parallel",),
            vmem_limit_bytes=32 * 1024 * 1024),
    )(off_rows, w_t)

    return out.reshape(*orig_shape, num_embeddings)


def _reference(offset, weight, bias):
    max_rel = (weight.shape[1] - 1) // 2
    d = jnp.clip(offset + max_rel, 0, 2 * max_rel)
    oh = jax.nn.one_hot(d, weight.shape[1], dtype=jnp.float32)
    return oh @ weight.T.astype(jnp.float32) + bias.astype(jnp.float32)


if __name__ == "__main__":
    key = jax.random.PRNGKey(0)
    k_w, k_b, k_o1, k_o2 = jax.random.split(key, 4)

    # Deterministic "Linear(65 -> 128)" parameters (synthetic, not a checkpoint).
    bound = 1.0 / jnp.sqrt(jnp.float32(NUM_CLASSES))
    weight = jax.random.uniform(k_w, (NUM_EMBEDDINGS, NUM_CLASSES),
                                jnp.float32, -bound, bound)
    bias = jax.random.uniform(k_b, (NUM_EMBEDDINGS,), jnp.float32, -bound, bound)

    # Case 1: pairwise relative offsets, batch=2, seq=16 -> offset (2, 16, 16).
    # n=512 < one chunk: exercises the pad path + single ragged output block.
    B, L = 2, 16
    idx = jnp.arange(L, dtype=jnp.int32)
    offset = (idx[None, :, None] - idx[None, None, :]) \
        + jax.random.randint(k_o1, (B, L, L), -40, 40, dtype=jnp.int32)

    out = jax.block_until_ready(positional_encodings(offset, weight, bias))
    ref = _reference(offset, weight, bias)
    assert out.shape == (B, L, L, NUM_EMBEDDINGS), out.shape
    assert jnp.allclose(out, ref, atol=1e-5, rtol=1e-5), "case 1 mismatch vs reference"

    # Case 2: n = 2*72*72 = 10368 > TM=8192 -> multi-block grid + ragged
    # input/output tails (exercises the no-slice writeback-drop path).
    B2, L2 = 2, 72
    off2 = jax.random.randint(k_o2, (B2, L2, L2), -80, 80, dtype=jnp.int32)
    out2 = jax.block_until_ready(positional_encodings(off2, weight, bias))
    ref2 = _reference(off2, weight, bias)
    assert out2.shape == (B2, L2, L2, NUM_EMBEDDINGS), out2.shape
    assert jnp.allclose(out2, ref2, atol=1e-5, rtol=1e-5), "case 2 mismatch vs reference"

    print("KERNEL_OK")
</pallas_src>

<mosaic_0001>
module attributes {stable_mosaic.version = 11 : i64} {
  func.func @_pos_enc_kernel(%arg0: i32, %arg1: memref<8x128xi32, #tpu.memory_space<vmem>>, %arg2: memref<128x128xf32, #tpu.memory_space<vmem>>, %arg3: memref<1024x128xf32, #tpu.memory_space<vmem>>) attributes {dimension_semantics = [#tpu.dimension_semantics<parallel>], iteration_bounds = array<i64: 1>, scalar_prefetch = 0 : i64, scratch_operands = 0 : i64, tpu.core_type = #tpu.core_type<tc>, window_params = [{transform_indices = @transform_0, window_bounds = array<i64: 8, 128>}, {pipeline_mode = #tpu.pipeline_mode<synchronous>, transform_indices = @transform_1, window_bounds = array<i64: 128, 128>}, {transform_indices = @transform_2, window_bounds = array<i64: 1024, 128>}]} {
    %0 = tpu.iota {dimensions = array<i32: 1>} : vector<128x128xi32>
    %c0_i32 = arith.constant 0 : i32
    %c8_i32 = arith.constant 8 : i32
    %1 = arith.muli %c0_i32, %c8_i32 : i32
    %2 = tpu.assume_multiple %1, 8 : i32
    %3 = arith.index_cast %2 : i32 to index
    %c0 = arith.constant 0 : index
    %4 = vector.load %arg1[%3, %c0] : memref<8x128xi32, #tpu.memory_space<vmem>>, vector<8x128xi32>
    %c32_i32 = arith.constant 32 : i32
    %5 = vector.broadcast %c32_i32 : i32 to vector<8x128xi32>
    %6 = arith.addi %4, %5 : vector<8x128xi32>
    %c0_i32_0 = arith.constant 0 : i32
    %c64_i32 = arith.constant 64 : i32
    %7 = vector.broadcast %c0_i32_0 : i32 to vector<8x128xi32>
    %8 = arith.maxsi %7, %6 : vector<8x128xi32>
    %9 = vector.broadcast %c64_i32 : i32 to vector<8x128xi32>
    %10 = arith.minsi %9, %8 : vector<8x128xi32>
    %11 = tpu.transpose %10, [1, 0] : vector<8x128xi32> -> vector<128x8xi32>
    %c1024_i32 = arith.constant 1024 : i32
    %12 = arith.muli %c0_i32, %c1024_i32 : i32
    %13 = tpu.assume_multiple %12, 1024 : i32
    %14 = vector.extract_strided_slice %11 {offsets = [0, 0], sizes = [128, 1], strides = [1, 1]} : vector<128x8xi32> to vector<128x1xi32>
    %15 = vector.broadcast %14 : vector<128x1xi32> to vector<128x128xi32>
    %16 = arith.cmpi eq, %0, %15 : vector<128x128xi32>
    %17 = arith.extui %16 : vector<128x128xi1> to vector<128x128xi32>
    %18 = arith.sitofp %17 : vector<128x128xi32> to vector<128x128xf32>
    %19 = vector.extract_strided_slice %11 {offsets = [0, 1], sizes = [128, 1], strides = [1, 1]} : vector<128x8xi32> to vector<128x1xi32>
    %20 = vector.broadcast %19 : vector<128x1xi32> to vector<128x128xi32>
    %21 = arith.cmpi eq, %0, %20 : vector<128x128xi32>
    %22 = arith.extui %21 : vector<128x128xi1> to vector<128x128xi32>
    %23 = arith.sitofp %22 : vector<128x128xi32> to vector<128x128xf32>
    %24 = tpu.concatenate %18, %23 in 0 : vector<128x128xf32>, vector<128x128xf32> -> vector<256x128xf32>
    %c0_1 = arith.constant 0 : index
    %c0_2 = arith.constant 0 : index
    %25 = vector.load %arg2[%c0_1, %c0_2] : memref<128x128xf32, #tpu.memory_space<vmem>>, vector<128x128xf32>
    %cst = arith.constant dense<0.000000e+00> : vector<256x128xf32>
    %26 = tpu.matmul %24, %25, %cst {dimension_numbers = #tpu.dot_dimension_numbers<[1], [0], [0], [1], [0, 0, 1, 1], [], []>} : vector<256x128xf32>, vector<128x128xf32>, vector<256x128xf32> -> vector<256x128xf32>
    %c0_i32_3 = arith.constant 0 : i32
    %27 = arith.addi %13, %c0_i32_3 : i32
    %28 = arith.index_cast %27 : i32 to index
    %c0_4 = arith.constant 0 : index
    %29 = vector.load %arg3[%28, %c0_4] : memref<1024x128xf32, #tpu.memory_space<vmem>>, vector<256x128xf32>
    tpu.vector_store %arg3[%28, %c0_4], %26 {strides = array<i32>} : memref<1024x128xf32, #tpu.memory_space<vmem>>, vector<256x128xf32>,
    %30 = vector.extract_strided_slice %11 {offsets = [0, 2], sizes = [128, 1], strides = [1, 1]} : vector<128x8xi32> to vector<128x1xi32>
    %31 = vector.broadcast %30 : vector<128x1xi32> to vector<128x128xi32>
    %32 = arith.cmpi eq, %0, %31 : vector<128x128xi32>
    %33 = arith.extui %32 : vector<128x128xi1> to vector<128x128xi32>
    %34 = arith.sitofp %33 : vector<128x128xi32> to vector<128x128xf32>
    %35 = vector.extract_strided_slice %11 {offsets = [0, 3], sizes = [128, 1], strides = [1, 1]} : vector<128x8xi32> to vector<128x1xi32>
    %36 = vector.broadcast %35 : vector<128x1xi32> to vector<128x128xi32>
    %37 = arith.cmpi eq, %0, %36 : vector<128x128xi32>
    %38 = arith.extui %37 : vector<128x128xi1> to vector<128x128xi32>
    %39 = arith.sitofp %38 : vector<128x128xi32> to vector<128x128xf32>
    %40 = tpu.concatenate %34, %39 in 0 : vector<128x128xf32>, vector<128x128xf32> -> vector<256x128xf32>
    %c0_5 = arith.constant 0 : index
    %c0_6 = arith.constant 0 : index
    %41 = vector.load %arg2[%c0_5, %c0_6] : memref<128x128xf32, #tpu.memory_space<vmem>>, vector<128x128xf32>
    %cst_7 = arith.constant dense<0.000000e+00> : vector<256x128xf32>
    %42 = tpu.matmul %40, %41, %cst_7 {dimension_numbers = #tpu.dot_dimension_numbers<[1], [0], [0], [1], [0, 0, 1, 1], [], []>} : vector<256x128xf32>, vector<128x128xf32>, vector<256x128xf32> -> vector<256x128xf32>
    %c256_i32 = arith.constant 256 : i32
    %43 = arith.addi %13, %c256_i32 : i32
    %44 = arith.index_cast %43 : i32 to index
    %c0_8 = arith.constant 0 : index
    %45 = vector.load %arg3[%44, %c0_8] : memref<1024x128xf32, #tpu.memory_space<vmem>>, vector<256x128xf32>
    tpu.vector_store %arg3[%44, %c0_8], %42 {strides = array<i32>} : memref<1024x128xf32, #tpu.memory_space<vmem>>, vector<256x128xf32>,
    %46 = vector.extract_strided_slice %11 {offsets = [0, 4], sizes = [128, 1], strides = [1, 1]} : vector<128x8xi32> to vector<128x1xi32>
    %47 = vector.broadcast %46 : vector<128x1xi32> to vector<128x128xi32>
    %48 = arith.cmpi eq, %0, %47 : vector<128x128xi32>
    %49 = arith.extui %48 : vector<128x128xi1> to vector<128x128xi32>
    %50 = arith.sitofp %49 : vector<128x128xi32> to vector<128x128xf32>
    %51 = vector.extract_strided_slice %11 {offsets = [0, 5], sizes = [128, 1], strides = [1, 1]} : vector<128x8xi32> to vector<128x1xi32>
    %52 = vector.broadcast %51 : vector<128x1xi32> to vector<128x128xi32>
    %53 = arith.cmpi eq, %0, %52 : vector<128x128xi32>
    %54 = arith.extui %53 : vector<128x128xi1> to vector<128x128xi32>
    %55 = arith.sitofp %54 : vector<128x128xi32> to vector<128x128xf32>
    %56 = tpu.concatenate %50, %55 in 0 : vector<128x128xf32>, vector<128x128xf32> -> vector<256x128xf32>
    %c0_9 = arith.constant 0 : index
    %c0_10 = arith.constant 0 : index
    %57 = vector.load %arg2[%c0_9, %c0_10] : memref<128x128xf32, #tpu.memory_space<vmem>>, vector<128x128xf32>
    %cst_11 = arith.constant dense<0.000000e+00> : vector<256x128xf32>
    %58 = tpu.matmul %56, %57, %cst_11 {dimension_numbers = #tpu.dot_dimension_numbers<[1], [0], [0], [1], [0, 0, 1, 1], [], []>} : vector<256x128xf32>, vector<128x128xf32>, vector<256x128xf32> -> vector<256x128xf32>
    %c512_i32 = arith.constant 512 : i32
    %59 = arith.addi %13, %c512_i32 : i32
    %60 = arith.index_cast %59 : i32 to index
    %c0_12 = arith.constant 0 : index
    %61 = vector.load %arg3[%60, %c0_12] : memref<1024x128xf32, #tpu.memory_space<vmem>>, vector<256x128xf32>
    tpu.vector_store %arg3[%60, %c0_12], %58 {strides = array<i32>} : memref<1024x128xf32, #tpu.memory_space<vmem>>, vector<256x128xf32>,
    %62 = vector.extract_strided_slice %11 {offsets = [0, 6], sizes = [128, 1], strides = [1, 1]} : vector<128x8xi32> to vector<128x1xi32>
    %63 = vector.broadcast %62 : vector<128x1xi32> to vector<128x128xi32>
    %64 = arith.cmpi eq, %0, %63 : vector<128x128xi32>
    %65 = arith.extui %64 : vector<128x128xi1> to vector<128x128xi32>
    %66 = arith.sitofp %65 : vector<128x128xi32> to vector<128x128xf32>
    %67 = vector.extract_strided_slice %11 {offsets = [0, 7], sizes = [128, 1], strides = [1, 1]} : vector<128x8xi32> to vector<128x1xi32>
    %68 = vector.broadcast %67 : vector<128x1xi32> to vector<128x128xi32>
    %69 = arith.cmpi eq, %0, %68 : vector<128x128xi32>
    %70 = arith.extui %69 : vector<128x128xi1> to vector<128x128xi32>
    %71 = arith.sitofp %70 : vector<128x128xi32> to vector<128x128xf32>
    %72 = tpu.concatenate %66, %71 in 0 : vector<128x128xf32>, vector<128x128xf32> -> vector<256x128xf32>
    %c0_13 = arith.constant 0 : index
    %c0_14 = arith.constant 0 : index
    %73 = vector.load %arg2[%c0_13, %c0_14] : memref<128x128xf32, #tpu.memory_space<vmem>>, vector<128x128xf32>
    %cst_15 = arith.constant dense<0.000000e+00> : vector<256x128xf32>
    %74 = tpu.matmul %72, %73, %cst_15 {dimension_numbers = #tpu.dot_dimension_numbers<[1], [0], [0], [1], [0, 0, 1, 1], [], []>} : vector<256x128xf32>, vector<128x128xf32>, vector<256x128xf32> -> vector<256x128xf32>
    %c768_i32 = arith.constant 768 : i32
    %75 = arith.addi %13, %c768_i32 : i32
    %76 = arith.index_cast %75 : i32 to index
    %c0_16 = arith.constant 0 : index
    %77 = vector.load %arg3[%76, %c0_16] : memref<1024x128xf32, #tpu.memory_space<vmem>>, vector<256x128xf32>
    tpu.vector_store %arg3[%76, %c0_16], %74 {strides = array<i32>} : memref<1024x128xf32, #tpu.memory_space<vmem>>, vector<256x128xf32>,
    %c1_i32 = arith.constant 1 : i32
    return
  }
  func.func @transform_0(%arg0: i32) -> (i32, i32) {
    %c0_i32 = arith.constant 0 : i32
    %c0_i32_0 = arith.constant 0 : i32
    return %arg0, %c0_i32 : i32, i32
  }
  func.func @transform_1(%arg0: i32) -> (i32, i32) {
    %c0_i32 = arith.constant 0 : i32
    %c0_i32_0 = arith.constant 0 : i32
    %c0_i32_1 = arith.constant 0 : i32
    return %c0_i32, %c0_i32_0 : i32, i32
  }
  func.func @transform_2(%arg0: i32) -> (i32, i32) {
    %c0_i32 = arith.constant 0 : i32
    %c0_i32_0 = arith.constant 0 : i32
    return %arg0, %c0_i32 : i32, i32
  }
}

</mosaic_0001>

<llo_original>
// kernel: tpu_custom_call.1
$region0: #{tpu_custom_call.1}
  #allocation0 [shape = 'u32[]', space=smem, size = 0x4, offset = 0x4, fixed_abs, tag = 'smem constant byte address 0x4 - core index']
  #allocation1 [shape = 'u32[144,128]{1,0:T(1,128)}', space=vmem, size = 0x12000, scoped, tag = 'internal scratch']
  %s0 = inlined_call_operand.hbm [shape: s32[8,128], index: 0, kind: input, shape index: {}]
  %s1 = inlined_call_operand.hbm [shape: f32[128,128], index: 1, kind: input, shape index: {}]
  %s2 = inlined_call_operand.hbm [shape: f32[512,128], index: 2, kind: output, shape index: {}]
  %s3 = sld [smem:[#allocation0]]
  $region26: #{tpu_custom_call.1} parent=0
    _
  %s5 = ssub.s32 1, %s3
  %s6 = scalar_select 0, %s5, %s3
  $region1: #{tpu_custom_call.1} parent=0
    #allocation2 [shape = 'u8[4096]{0}', space=vmem, size = 0x1000, scoped, tag = 'input window, operand 0, single buffered']
    #allocation3 [shape = 's32[1]{0}', space=sflag, size = 0x4, scoped, tag = 'scoped memory for tpu_custom_call.1']
    #allocation4 [shape = 's32[1]{0}', space=sflag, size = 0x4, scoped, tag = 'scoped memory for tpu_custom_call.1']
    #allocation5 [shape = 'u8[65536]{0}', space=vmem, size = 0x10000, scoped, tag = 'input window, operand 1, single buffered']
    #allocation6 [shape = 's32[1]{0}', space=sflag, size = 0x4, scoped, tag = 'scoped memory for tpu_custom_call.1']
    #allocation7 [shape = 'u8[524288]{0}', space=vmem, size = 0x80000, scoped, tag = 'output window, operand 0, single buffered']
    %7 = vsyncpa [#allocation3], 0
    %8 = vsyncpa [#allocation6], 0
    %9 = vsyncpa [#allocation4], 0
    // Predicated region
    $region2: #{tpu_custom_call.1} parent=1 // pred_check
      _
    $region3: #{tpu_custom_call.1} parent=1 // pred_check_branch
      %11 = sbr.rel (0) target = $region5
    $region4: #{tpu_custom_call.1} parent=1 // pred_region
      %s13 = ssub.s32 128, 128
      %14 = vsyncadd [#allocation3], %s13
      %s16 = sshll.u32 [#allocation2], 4
      %s17 = int_to_ptr.vmem [resolvable:$true] %s16
      %19 = dma.hbm_to_vmem [thread:$0]  %s0, 128, %s17, [#allocation3]
    $region5: #{tpu_custom_call.1} parent=1 // pred_fallthru
      _
    // Predicated region
    $region6: #{tpu_custom_call.1} parent=1 // pred_check
      _
    $region7: #{tpu_custom_call.1} parent=1 // pred_check_branch
      %21 = sbr.rel (0) target = $region9
    $region8: #{tpu_custom_call.1} parent=1 // pred_region
      %s23 = ssub.s32 2048, 2048
      %24 = vsyncadd [#allocation6], %s23
      %s25 = sshll.u32 [#allocation5], 4
      %s26 = int_to_ptr.vmem [resolvable:$true] %s25
      %31 = dma.hbm_to_vmem [thread:$0]  %s1, 2048, %s26, [#allocation6], 128, 128, 8
    $region9: #{tpu_custom_call.1} parent=1 // pred_fallthru
      _
    // Predicated region
    $region10: #{tpu_custom_call.1} parent=1 // pred_check
      _
    $region11: #{tpu_custom_call.1} parent=1 // pred_check_branch
      %33 = sbr.rel (0) target = $region13
    $region12: #{tpu_custom_call.1} parent=1 // pred_region
      %34 = dma.done [#allocation3], 128
    $region13: #{tpu_custom_call.1} parent=1 // pred_fallthru
      _
    // Predicated region
    $region14: #{tpu_custom_call.1} parent=1 // pred_check
      _
    $region15: #{tpu_custom_call.1} parent=1 // pred_check_branch
      %36 = sbr.rel (0) target = $region17
    $region16: #{tpu_custom_call.1} parent=1 // pred_region
      %37 = dma.done [#allocation6], 2048
    $region17: #{tpu_custom_call.1} parent=1 // pred_fallthru
      _
    %v38 = vlaneseq
    %v39 = vand.u32 %v38, 127
    %v40 = vld [vmem:[#allocation2] sm:$0xff]
    %v41 = vadd.s32 %v40, 32
    %vm42 = vcmp.gt.s32.totalorder %v41, 0
    %v43 = vsel %vm42, %v41, 0
    %vm44 = vcmp.lt.s32.totalorder %v43, 64
    %v45 = vsel %vm44, %v43, 64
    %46 = vxpose.xlu0.b32.start [1/16] %v45, 128
    %47 = vxpose.xlu0.b32.cont [2/16] 0, 128
    %48 = vxpose.xlu0.b32.cont [3/16] 0, 128
    %49 = vxpose.xlu0.b32.cont [4/16] 0, 128
    %50 = vxpose.xlu0.b32.cont [5/16] 0, 128
    %51 = vxpose.xlu0.b32.cont [6/16] 0, 128
    %52 = vxpose.xlu0.b32.cont [7/16] 0, 128
    %53 = vxpose.xlu0.b32.cont [8/16] 0, 128
    %54 = vxpose.xlu0.b32.cont [9/16] 0, 128
    %55 = vxpose.xlu0.b32.cont [10/16] 0, 128
    %56 = vxpose.xlu0.b32.cont [11/16] 0, 128
    %57 = vxpose.xlu0.b32.cont [12/16] 0, 128
    %58 = vxpose.xlu0.b32.cont [13/16] 0, 128
    %59 = vxpose.xlu0.b32.cont [14/16] 0, 128
    %60 = vxpose.xlu0.b32.cont [15/16] 0, 128
    %61 = vxpose.xlu0.b32.end [16/16] 0, 128
    %v62 = vpop.trf.xlu0
    %v63 = vpop.trf.xlu0
    %v64 = vpop.trf.xlu0
    %v65 = vpop.trf.xlu0
    %v66 = vpop.trf.xlu0
    %v67 = vpop.trf.xlu0
    %v68 = vpop.trf.xlu0
    %v69 = vpop.trf.xlu0
    %v70 = vpop.trf.xlu0
    %v71 = vpop.trf.xlu0
    %v72 = vpop.trf.xlu0
    %v73 = vpop.trf.xlu0
    %v74 = vpop.trf.xlu0
    %v75 = vpop.trf.xlu0
    %v76 = vpop.trf.xlu0
    %v77 = vpop.trf.xlu0
    %78 = vset.pattern.permute.xlu0 0
    %79 = vperm.xlu0 %78, %v62
    %v80 = vpop.permute.xlu0 %79
    %81 = vset.pattern.permute.xlu0 0
    %82 = vperm.xlu0 %81, %v63
    %v83 = vpop.permute.xlu0 %82
    %84 = vset.pattern.permute.xlu0 0
    %85 = vperm.xlu0 %84, %v64
    %v86 = vpop.permute.xlu0 %85
    %87 = vset.pattern.permute.xlu0 0
    %88 = vperm.xlu0 %87, %v65
    %v89 = vpop.permute.xlu0 %88
    %90 = vset.pattern.permute.xlu0 0
    %91 = vperm.xlu0 %90, %v66
    %v92 = vpop.permute.xlu0 %91
    %93 = vset.pattern.permute.xlu0 0
    %94 = vperm.xlu0 %93, %v67
    %v95 = vpop.permute.xlu0 %94
    %96 = vset.pattern.permute.xlu0 0
    %97 = vperm.xlu0 %96, %v68
    %v98 = vpop.permute.xlu0 %97
    %99 = vset.pattern.permute.xlu0 0
    %100 = vperm.xlu0 %99, %v69
    %v101 = vpop.permute.xlu0 %100
    %102 = vset.pattern.permute.xlu0 0
    %103 = vperm.xlu0 %102, %v70
    %v104 = vpop.permute.xlu0 %103
    %105 = vset.pattern.permute.xlu0 0
    %106 = vperm.xlu0 %105, %v71
    %v107 = vpop.permute.xlu0 %106
    %108 = vset.pattern.permute.xlu0 0
    %109 = vperm.xlu0 %108, %v72
    %v110 = vpop.permute.xlu0 %109
    %111 = vset.pattern.permute.xlu0 0
    %112 = vperm.xlu0 %111, %v73
    %v113 = vpop.permute.xlu0 %112
    %114 = vset.pattern.permute.xlu0 0
    %115 = vperm.xlu0 %114, %v74
    %v116 = vpop.permute.xlu0 %115
    %117 = vset.pattern.permute.xlu0 0
    %118 = vperm.xlu0 %117, %v75
    %v119 = vpop.permute.xlu0 %118
    %120 = vset.pattern.permute.xlu0 0
    %121 = vperm.xlu0 %120, %v76
    %v122 = vpop.permute.xlu0 %121
    %123 = vset.pattern.permute.xlu0 0
    %124 = vperm.xlu0 %123, %v77
    %v125 = vpop.permute.xlu0 %124
    %vm126 = vcmp.eq.s32.totalorder %v39, %v80
    %vm127 = vcmp.eq.s32.totalorder %v39, %v83
    %vm128 = vcmp.eq.s32.totalorder %v39, %v86
    %vm129 = vcmp.eq.s32.totalorder %v39, %v89
    %vm130 = vcmp.eq.s32.totalorder %v39, %v92
    %vm131 = vcmp.eq.s32.totalorder %v39, %v95
    %vm132 = vcmp.eq.s32.totalorder %v39, %v98
    %vm133 = vcmp.eq.s32.totalorder %v39, %v101
    %vm134 = vcmp.eq.s32.totalorder %v39, %v104
    %vm135 = vcmp.eq.s32.totalorder %v39, %v107
    %vm136 = vcmp.eq.s32.totalorder %v39, %v110
    %vm137 = vcmp.eq.s32.totalorder %v39, %v113
    %vm138 = vcmp.eq.s32.totalorder %v39, %v116
    %vm139 = vcmp.eq.s32.totalorder %v39, %v119
    %vm140 = vcmp.eq.s32.totalorder %v39, %v122
    %vm141 = vcmp.eq.s32.totalorder %v39, %v125
    %v142 = vsel %vm126, 1, 0
    %v143 = vsel %vm127, 1, 0
    %v144 = vsel %vm128, 1, 0
    %v145 = vsel %vm129, 1, 0
    %v146 = vsel %vm130, 1, 0
    %v147 = vsel %vm131, 1, 0
    %v148 = vsel %vm132, 1, 0
    %v149 = vsel %vm133, 1, 0
    %v150 = vsel %vm134, 1, 0
    %v151 = vsel %vm135, 1, 0
    %v152 = vsel %vm136, 1, 0
    %v153 = vsel %vm137, 1, 0
    %v154 = vsel %vm138, 1, 0
    %v155 = vsel %vm139, 1, 0
    %v156 = vsel %vm140, 1, 0
    %v157 = vsel %vm141, 1, 0
    %v158 = vcvt.s32.f32 %v142
    %v159 = vcvt.s32.f32 %v143
    %v160 = vcvt.s32.f32 %v144
    %v161 = vcvt.s32.f32 %v145
    %v162 = vcvt.s32.f32 %v146
    %v163 = vcvt.s32.f32 %v147
    %v164 = vcvt.s32.f32 %v148
    %v165 = vcvt.s32.f32 %v149
    %v166 = vcvt.s32.f32 %v150
    %v167 = vcvt.s32.f32 %v151
    %v168 = vcvt.s32.f32 %v152
    %v169 = vcvt.s32.f32 %v153
    %v170 = vcvt.s32.f32 %v154
    %v171 = vcvt.s32.f32 %v155
    %v172 = vcvt.s32.f32 %v156
    %v173 = vcvt.s32.f32 %v157
    %174 = vset.pattern.permute.xlu0 1
    %175 = vperm.xlu0 %174, %v62
    %v176 = vpop.permute.xlu0 %175
    %177 = vset.pattern.permute.xlu0 1
    %178 = vperm.xlu0 %177, %v63
    %v179 = vpop.permute.xlu0 %178
    %180 = vset.pattern.permute.xlu0 1
    %181 = vperm.xlu0 %180, %v64
    %v182 = vpop.permute.xlu0 %181
    %183 = vset.pattern.permute.xlu0 1
    %184 = vperm.xlu0 %183, %v65
    %v185 = vpop.permute.xlu0 %184
    %186 = vset.pattern.permute.xlu0 1
    %187 = vperm.xlu0 %186, %v66
    %v188 = vpop.permute.xlu0 %187
    %189 = vset.pattern.permute.xlu0 1
    %190 = vperm.xlu0 %189, %v67
    %v191 = vpop.permute.xlu0 %190
    %192 = vset.pattern.permute.xlu0 1
    %193 = vperm.xlu0 %192, %v68
    %v194 = vpop.permute.xlu0 %193
    %195 = vset.pattern.permute.xlu0 1
    %196 = vperm.xlu0 %195, %v69
    %v197 = vpop.permute.xlu0 %196
    %198 = vset.pattern.permute.xlu0 1
    %199 = vperm.xlu0 %198, %v70
    %v200 = vpop.permute.xlu0 %199
    %201 = vset.pattern.permute.xlu0 1
    %202 = vperm.xlu0 %201, %v71
    %v203 = vpop.permute.xlu0 %202
    %204 = vset.pattern.permute.xlu0 1
    %205 = vperm.xlu0 %204, %v72
    %v206 = vpop.permute.xlu0 %205
    %207 = vset.pattern.permute.xlu0 1
    %208 = vperm.xlu0 %207, %v73
    %v209 = vpop.permute.xlu0 %208
    %210 = vset.pattern.permute.xlu0 1
    %211 = vperm.xlu0 %210, %v74
    %v212 = vpop.permute.xlu0 %211
    %213 = vset.pattern.permute.xlu0 1
    %214 = vperm.xlu0 %213, %v75
    %v215 = vpop.permute.xlu0 %214
    %216 = vset.pattern.permute.xlu0 1
    %217 = vperm.xlu0 %216, %v76
    %v218 = vpop.permute.xlu0 %217
    %219 = vset.pattern.permute.xlu0 1
    %220 = vperm.xlu0 %219, %v77
    %v221 = vpop.permute.xlu0 %220
    %vm222 = vcmp.eq.s32.totalorder %v39, %v176
    %vm223 = vcmp.eq.s32.totalorder %v39, %v179
    %vm224 = vcmp.eq.s32.totalorder %v39, %v182
    %vm225 = vcmp.eq.s32.totalorder %v39, %v185
    %vm226 = vcmp.eq.s32.totalorder %v39, %v188
    %vm227 = vcmp.eq.s32.totalorder %v39, %v191
    %vm228 = vcmp.eq.s32.totalorder %v39, %v194
    %vm229 = vcmp.eq.s32.totalorder %v39, %v197
    %vm230 = vcmp.eq.s32.totalorder %v39, %v200
    %vm231 = vcmp.eq.s32.totalorder %v39, %v203
    %vm232 = vcmp.eq.s32.totalorder %v39, %v206
    %vm233 = vcmp.eq.s32.totalorder %v39, %v209
    %vm234 = vcmp.eq.s32.totalorder %v39, %v212
    %vm235 = vcmp.eq.s32.totalorder %v39, %v215
    %vm236 = vcmp.eq.s32.totalorder %v39, %v218
    %vm237 = vcmp.eq.s32.totalorder %v39, %v221
    %v238 = vsel %vm222, 1, 0
    %v239 = vsel %vm223, 1, 0
    %v240 = vsel %vm224, 1, 0
    %v241 = vsel %vm225, 1, 0
    %v242 = vsel %vm226, 1, 0
    %v243 = vsel %vm227, 1, 0
    %v244 = vsel %vm228, 1, 0
    %v245 = vsel %vm229, 1, 0
    %v246 = vsel %vm230, 1, 0
    %v247 = vsel %vm231, 1, 0
    %v248 = vsel %vm232, 1, 0
    %v249 = vsel %vm233, 1, 0
    %v250 = vsel %vm234, 1, 0
    %v251 = vsel %vm235, 1, 0
    %v252 = vsel %vm236, 1, 0
    %v253 = vsel %vm237, 1, 0
    %v254 = vcvt.s32.f32 %v238
    %v255 = vcvt.s32.f32 %v239
    %v256 = vcvt.s32.f32 %v240
    %v257 = vcvt.s32.f32 %v241
    %v258 = vcvt.s32.f32 %v242
    %v259 = vcvt.s32.f32 %v243
    %v260 = vcvt.s32.f32 %v244
    %v261 = vcvt.s32.f32 %v245
    %v262 = vcvt.s32.f32 %v246
    %v263 = vcvt.s32.f32 %v247
    %v264 = vcvt.s32.f32 %v248
    %v265 = vcvt.s32.f32 %v249
    %v266 = vcvt.s32.f32 %v250
    %v267 = vcvt.s32.f32 %v251
    %v268 = vcvt.s32.f32 %v252
    %v269 = vcvt.s32.f32 %v253
    %v270 = vld [vmem:[#allocation5] sm:$0xff]
    %v271 = vld [vmem:[#allocation5 + $0x8] sm:$0xff]
    %v272 = vld [vmem:[#allocation5 + $0x10] sm:$0xff]
    %v273 = vld [vmem:[#allocation5 + $0x18] sm:$0xff]
    %v274 = vld [vmem:[#allocation5 + $0x20] sm:$0xff]
    %v275 = vld [vmem:[#allocation5 + $0x28] sm:$0xff]
    %v276 = vld [vmem:[#allocation5 + $0x30] sm:$0xff]
    %v277 = vld [vmem:[#allocation5 + $0x38] sm:$0xff]
    %v278 = vld [vmem:[#allocation5 + $0x40] sm:$0xff]
    %v279 = vld [vmem:[#allocation5 + $0x48] sm:$0xff]
    %v280 = vld [vmem:[#allocation5 + $0x50] sm:$0xff]
    %v281 = vld [vmem:[#allocation5 + $0x58] sm:$0xff]
    %v282 = vld [vmem:[#allocation5 + $0x60] sm:$0xff]
    %v283 = vld [vmem:[#allocation5 + $0x68] sm:$0xff]
    %v284 = vld [vmem:[#allocation5 + $0x70] sm:$0xff]
    %v285 = vld [vmem:[#allocation5 + $0x78] sm:$0xff]
    %286 = vmatprep.subr.mxu0 0.0
    %287 = vmatpush1.msra.mxu0 %v270
    %288 = vmatprep.subr.mxu0 0.0
    %289 = vmatpush1.msra.mxu0 %v271
    %290 = vmatprep.subr.mxu0 0.0
    %291 = vmatpush1.msra.mxu0 %v272
    %292 = vmatprep.subr.mxu0 0.0
    %293 = vmatpush1.msra.mxu0 %v273
    %294 = vmatprep.subr.mxu0 0.0
    %295 = vmatpush1.msra.mxu0 %v274
    %296 = vmatprep.subr.mxu0 0.0
    %297 = vmatpush1.msra.mxu0 %v275
    %298 = vmatprep.subr.mxu0 0.0
    %299 = vmatpush1.msra.mxu0 %v276
    %300 = vmatprep.subr.mxu0 0.0
    %301 = vmatpush1.msra.mxu0 %v277
    %302 = vmatprep.subr.mxu0 0.0
    %303 = vmatpush1.msra.mxu0 %v278
    %304 = vmatprep.subr.mxu0 0.0
    %305 = vmatpush1.msra.mxu0 %v279
    %306 = vmatprep.subr.mxu0 0.0
    %307 = vmatpush1.msra.mxu0 %v280
    %308 = vmatprep.subr.mxu0 0.0
    %309 = vmatpush1.msra.mxu0 %v281
    %310 = vmatprep.subr.mxu0 0.0
    %311 = vmatpush1.msra.mxu0 %v282
    %312 = vmatprep.subr.mxu0 0.0
    %313 = vmatpush1.msra.mxu0 %v283
    %314 = vmatprep.subr.mxu0 0.0
    %315 = vmatpush1.msra.mxu0 %v284
    %316 = vmatprep.subr.mxu0 0.0
    %317 = vmatpush1.msra.mxu0 %v285
    %318 = vmatprep.subr.mxu0 0.0
    %319 = vmatpush1.msra.mxu0 0.0
    %320 = vmatprep.subr.mxu0 0.0
    %321 = vmatpush1.msra.mxu0 0.0
    %322 = vmatprep.subr.mxu0 0.0
    %323 = vmatpush1.msra.mxu0 0.0
    %324 = vmatprep.subr.mxu0 0.0
    %325 = vmatpush1.msra.mxu0 0.0
    %326 = vmatprep.subr.mxu0 0.0
    %327 = vmatpush1.msra.mxu0 0.0
    %328 = vmatprep.subr.mxu0 0.0
    %329 = vmatpush1.msra.mxu0 0.0
    %330 = vmatprep.subr.mxu0 0.0
    %331 = vmatpush1.msra.mxu0 0.0
    %332 = vmatprep.subr.mxu0 0.0
    %333 = vmatpush1.msra.mxu0 0.0
    %334 = vmatprep.subr.mxu0 0.0
    %335 = vmatpush1.msra.mxu0 0.0
    %336 = vmatprep.subr.mxu0 0.0
    %337 = vmatpush1.msra.mxu0 0.0
    %338 = vmatprep.subr.mxu0 0.0
    %339 = vmatpush1.msra.mxu0 0.0
    %340 = vmatprep.subr.mxu0 0.0
    %341 = vmatpush1.msra.mxu0 0.0
    %342 = vmatprep.subr.mxu0 0.0
    %343 = vmatpush1.msra.mxu0 0.0
    %344 = vmatprep.subr.mxu0 0.0
    %345 = vmatpush1.msra.mxu0 0.0
    %346 = vmatprep.subr.mxu0 0.0
    %347 = vmatpush1.msra.mxu0 0.0
    %348 = vmatprep.subr.mxu0 0.0
    %349 = vmatpush1.msra.mxu0 0.0
    %350 = vmatprep.mubr.f32.mxu0 0.0
    %351 = vmatmul.mubr.f32.gmra.mrb[0].mxu0 %v158
    %v352 = vpop.f32.mrb[0].mxu0
    %v353 = vadd.f32 0.0, %v352
    %v354 = vpop.f32.mrb[0].mxu0
    %355 = vmatprep.mubr.f32.mxu0 0.0
    %356 = vmatmul.mubr.f32.gmra.mrb[0].mxu0 %v159
    %v357 = vpop.f32.mrb[0].mxu0
    %v358 = vadd.f32 0.0, %v357
    %v359 = vpop.f32.mrb[0].mxu0
    %360 = vmatprep.mubr.f32.mxu0 0.0
    %361 = vmatmul.mubr.f32.gmra.mrb[0].mxu0 %v160
    %v362 = vpop.f32.mrb[0].mxu0
    %v363 = vadd.f32 0.0, %v362
    %v364 = vpop.f32.mrb[0].mxu0
    %365 = vmatprep.mubr.f32.mxu0 0.0
    %366 = vmatmul.mubr.f32.gmra.mrb[0].mxu0 %v161
    %v367 = vpop.f32.mrb[0].mxu0
    %v368 = vadd.f32 0.0, %v367
    %v369 = vpop.f32.mrb[0].mxu0
    %370 = vmatprep.mubr.f32.mxu0 0.0
    %371 = vmatmul.mubr.f32.gmra.mrb[0].mxu0 %v162
    %v372 = vpop.f32.mrb[0].mxu0
    %v373 = vadd.f32 0.0, %v372
    %v374 = vpop.f32.mrb[0].mxu0
    %375 = vmatprep.mubr.f32.mxu0 0.0
    %376 = vmatmul.mubr.f32.gmra.mrb[0].mxu0 %v163
    %v377 = vpop.f32.mrb[0].mxu0
    %v378 = vadd.f32 0.0, %v377
    %v379 = vpop.f32.mrb[0].mxu0
    %380 = vmatprep.mubr.f32.mxu0 0.0
    %381 = vmatmul.mubr.f32.gmra.mrb[0].mxu0 %v164
    %v382 = vpop.f32.mrb[0].mxu0
    %v383 = vadd.f32 0.0, %v382
    %v384 = vpop.f32.mrb[0].mxu0
    %385 = vmatprep.mubr.f32.mxu0 0.0
    %386 = vmatmul.mubr.f32.gmra.mrb[0].mxu0 %v165
    %v387 = vpop.f32.mrb[0].mxu0
    %v388 = vadd.f32 0.0, %v387
    %v389 = vpop.f32.mrb[0].mxu0
    %390 = vmatprep.mubr.f32.mxu0 0.0
    %391 = vmatmul.mubr.f32.gmra.mrb[0].mxu0 %v166
    %v392 = vpop.f32.mrb[0].mxu0
    %v393 = vadd.f32 0.0, %v392
    %v394 = vpop.f32.mrb[0].mxu0
    %395 = vmatprep.mubr.f32.mxu0 0.0
    %396 = vmatmul.mubr.f32.gmra.mrb[0].mxu0 %v167
    %v397 = vpop.f32.mrb[0].mxu0
    %v398 = vadd.f32 0.0, %v397
    %v399 = vpop.f32.mrb[0].mxu0
    %400 = vmatprep.mubr.f32.mxu0 0.0
    %401 = vmatmul.mubr.f32.gmra.mrb[0].mxu0 %v168
    %v402 = vpop.f32.mrb[0].mxu0
    %v403 = vadd.f32 0.0, %v402
    %v404 = vpop.f32.mrb[0].mxu0
    %405 = vmatprep.mubr.f32.mxu0 0.0
    %406 = vmatmul.mubr.f32.gmra.mrb[0].mxu0 %v169
    %v407 = vpop.f32.mrb[0].mxu0
    %v408 = vadd.f32 0.0, %v407
    %v409 = vpop.f32.mrb[0].mxu0
    %410 = vmatprep.mubr.f32.mxu0 0.0
    %411 = vmatmul.mubr.f32.gmra.mrb[0].mxu0 %v170
    %v412 = vpop.f32.mrb[0].mxu0
    %v413 = vadd.f32 0.0, %v412
    %v414 = vpop.f32.mrb[0].mxu0
    %415 = vmatprep.mubr.f32.mxu0 0.0
    %416 = vmatmul.mubr.f32.gmra.mrb[0].mxu0 %v171
    %v417 = vpop.f32.mrb[0].mxu0
    %v418 = vadd.f32 0.0, %v417
    %v419 = vpop.f32.mrb[0].mxu0
    %420 = vmatprep.mubr.f32.mxu0 0.0
    %421 = vmatmul.mubr.f32.gmra.mrb[0].mxu0 %v172
    %v422 = vpop.f32.mrb[0].mxu0
    %v423 = vadd.f32 0.0, %v422
    %v424 = vpop.f32.mrb[0].mxu0
    %425 = vmatprep.mubr.f32.mxu0 0.0
    %426 = vmatmul.mubr.f32.gmra.mrb[0].mxu0 %v173
    %v427 = vpop.f32.mrb[0].mxu0
    %v428 = vadd.f32 0.0, %v427
    %v429 = vpop.f32.mrb[0].mxu0
    %430 = vmatprep.mubr.f32.mxu0 0.0
    %431 = vmatmul.mubr.f32.gmra.mrb[0].mxu0 %v254
    %v432 = vpop.f32.mrb[0].mxu0
    %v433 = vadd.f32 0.0, %v432
    %v434 = vpop.f32.mrb[0].mxu0
    %435 = vmatprep.mubr.f32.mxu0 0.0
    %436 = vmatmul.mubr.f32.gmra.mrb[0].mxu0 %v255
    %v437 = vpop.f32.mrb[0].mxu0
    %v438 = vadd.f32 0.0, %v437
    %v439 = vpop.f32.mrb[0].mxu0
    %440 = vmatprep.mubr.f32.mxu0 0.0
    %441 = vmatmul.mubr.f32.gmra.mrb[0].mxu0 %v256
    %v442 = vpop.f32.mrb[0].mxu0
    %v443 = vadd.f32 0.0, %v442
    %v444 = vpop.f32.mrb[0].mxu0
    %445 = vmatprep.mubr.f32.mxu0 0.0
    %446 = vmatmul.mubr.f32.gmra.mrb[0].mxu0 %v257
    %v447 = vpop.f32.mrb[0].mxu0
    %v448 = vadd.f32 0.0, %v447
    %v449 = vpop.f32.mrb[0].mxu0
    %450 = vmatprep.mubr.f32.mxu0 0.0
    %451 = vmatmul.mubr.f32.gmra.mrb[0].mxu0 %v258
    %v452 = vpop.f32.mrb[0].mxu0
    %v453 = vadd.f32 0.0, %v452
    %v454 = vpop.f32.mrb[0].mxu0
    %455 = vmatprep.mubr.f32.mxu0 0.0
    %456 = vmatmul.mubr.f32.gmra.mrb[0].mxu0 %v259
    %v457 = vpop.f32.mrb[0].mxu0
    %v458 = vadd.f32 0.0, %v457
    %v459 = vpop.f32.mrb[0].mxu0
    %460 = vmatprep.mubr.f32.mxu0 0.0
    %461 = vmatmul.mubr.f32.gmra.mrb[0].mxu0 %v260
    %v462 = vpop.f32.mrb[0].mxu0
    %v463 = vadd.f32 0.0, %v462
    %v464 = vpop.f32.mrb[0].mxu0
    %465 = vmatprep.mubr.f32.mxu0 0.0
    %466 = vmatmul.mubr.f32.gmra.mrb[0].mxu0 %v261
    %v467 = vpop.f32.mrb[0].mxu0
    %v468 = vadd.f32 0.0, %v467
    %v469 = vpop.f32.mrb[0].mxu0
    %470 = vmatprep.mubr.f32.mxu0 0.0
    %471 = vmatmul.mubr.f32.gmra.mrb[0].mxu0 %v262
    %v472 = vpop.f32.mrb[0].mxu0
    %v473 = vadd.f32 0.0, %v472
    %v474 = vpop.f32.mrb[0].mxu0
    %475 = vmatprep.mubr.f32.mxu0 0.0
    %476 = vmatmul.mubr.f32.gmra.mrb[0].mxu0 %v263
    %v477 = vpop.f32.mrb[0].mxu0
    %v478 = vadd.f32 0.0, %v477
    %v479 = vpop.f32.mrb[0].mxu0
    %480 = vmatprep.mubr.f32.mxu0 0.0
    %481 = vmatmul.mubr.f32.gmra.mrb[0].mxu0 %v264
    %v482 = vpop.f32.mrb[0].mxu0
    %v483 = vadd.f32 0.0, %v482
    %v484 = vpop.f32.mrb[0].mxu0
    %485 = vmatprep.mubr.f32.mxu0 0.0
    %486 = vmatmul.mubr.f32.gmra.mrb[0].mxu0 %v265
    %v487 = vpop.f32.mrb[0].mxu0
    %v488 = vadd.f32 0.0, %v487
    %v489 = vpop.f32.mrb[0].mxu0
    %490 = vmatprep.mubr.f32.mxu0 0.0
    %491 = vmatmul.mubr.f32.gmra.mrb[0].mxu0 %v266
    %v492 = vpop.f32.mrb[0].mxu0
    %v493 = vadd.f32 0.0, %v492
    %v494 = vpop.f32.mrb[0].mxu0
    %495 = vmatprep.mubr.f32.mxu0 0.0
    %496 = vmatmul.mubr.f32.gmra.mrb[0].mxu0 %v267
    %v497 = vpop.f32.mrb[0].mxu0
    %v498 = vadd.f32 0.0, %v497
    %v499 = vpop.f32.mrb[0].mxu0
    %500 = vmatprep.mubr.f32.mxu0 0.0
    %501 = vmatmul.mubr.f32.gmra.mrb[0].mxu0 %v268
    %v502 = vpop.f32.mrb[0].mxu0
    %v503 = vadd.f32 0.0, %v502
    %v504 = vpop.f32.mrb[0].mxu0
    %505 = vmatprep.mubr.f32.mxu0 0.0
    %506 = vmatmul.mubr.f32.gmra.mrb[0].mxu0 %v269
    %v507 = vpop.f32.mrb[0].mxu0
    %v508 = vadd.f32 0.0, %v507
    %v509 = vpop.f32.mrb[0].mxu0
    %510 = vdwg.mxu0
    %511 = vst [vmem:[#allocation7] sm:$0xff] %v353
    %512 = vst [vmem:[#allocation7 + $0x8] sm:$0xff] %v358
    %513 = vst [vmem:[#allocation7 + $0x10] sm:$0xff] %v363
    %514 = vst [vmem:[#allocation7 + $0x18] sm:$0xff] %v368
    %515 = vst [vmem:[#allocation7 + $0x20] sm:$0xff] %v373
    %516 = vst [vmem:[#allocation7 + $0x28] sm:$0xff] %v378
    %517 = vst [vmem:[#allocation7 + $0x30] sm:$0xff] %v383
    %518 = vst [vmem:[#allocation7 + $0x38] sm:$0xff] %v388
    %519 = vst [vmem:[#allocation7 + $0x40] sm:$0xff] %v393
    %520 = vst [vmem:[#allocation7 + $0x48] sm:$0xff] %v398
    %521 = vst [vmem:[#allocation7 + $0x50] sm:$0xff] %v403
    %522 = vst [vmem:[#allocation7 + $0x58] sm:$0xff] %v408
    %523 = vst [vmem:[#allocation7 + $0x60] sm:$0xff] %v413
    %524 = vst [vmem:[#allocation7 + $0x68] sm:$0xff] %v418
    %525 = vst [vmem:[#allocation7 + $0x70] sm:$0xff] %v423
    %526 = vst [vmem:[#allocation7 + $0x78] sm:$0xff] %v428
    %527 = vst [vmem:[#allocation7 + $0x80] sm:$0xff] %v433
    %528 = vst [vmem:[#allocation7 + $0x88] sm:$0xff] %v438
    %529 = vst [vmem:[#allocation7 + $0x90] sm:$0xff] %v443
    %530 = vst [vmem:[#allocation7 + $0x98] sm:$0xff] %v448
    %531 = vst [vmem:[#allocation7 + $0xa0] sm:$0xff] %v453
    %532 = vst [vmem:[#allocation7 + $0xa8] sm:$0xff] %v458
    %533 = vst [vmem:[#allocation7 + $0xb0] sm:$0xff] %v463
    %534 = vst [vmem:[#allocation7 + $0xb8] sm:$0xff] %v468
    %535 = vst [vmem:[#allocation7 + $0xc0] sm:$0xff] %v473
    %536 = vst [vmem:[#allocation7 + $0xc8] sm:$0xff] %v478
    %537 = vst [vmem:[#allocation7 + $0xd0] sm:$0xff] %v483
    %538 = vst [vmem:[#allocation7 + $0xd8] sm:$0xff] %v488
    %539 = vst [vmem:[#allocation7 + $0xe0] sm:$0xff] %v493
    %540 = vst [vmem:[#allocation7 + $0xe8] sm:$0xff] %v498
    %541 = vst [vmem:[#allocation7 + $0xf0] sm:$0xff] %v503
    %542 = vst [vmem:[#allocation7 + $0xf8] sm:$0xff] %v508
    %543 = vset.pattern.permute.xlu0 2
    %544 = vperm.xlu0 %543, %v62
    %v545 = vpop.permute.xlu0 %544
    %546 = vset.pattern.permute.xlu0 2
    %547 = vperm.xlu0 %546, %v63
    %v548 = vpop.permute.xlu0 %547
    %549 = vset.pattern.permute.xlu0 2
    %550 = vperm.xlu0 %549, %v64
    %v551 = vpop.permute.xlu0 %550
    %552 = vset.pattern.permute.xlu0 2
    %553 = vperm.xlu0 %552, %v65
    %v554 = vpop.permute.xlu0 %553
    %555 = vset.pattern.permute.xlu0 2
    %556 = vperm.xlu0 %555, %v66
    %v557 = vpop.permute.xlu0 %556
    %558 = vset.pattern.permute.xlu0 2
    %559 = vperm.xlu0 %558, %v67
    %v560 = vpop.permute.xlu0 %559
    %561 = vset.pattern.permute.xlu0 2
    %562 = vperm.xlu0 %561, %v68
    %v563 = vpop.permute.xlu0 %562
    %564 = vset.pattern.permute.xlu0 2
    %565 = vperm.xlu0 %564, %v69
    %v566 = vpop.permute.xlu0 %565
    %567 = vset.pattern.permute.xlu0 2
    %568 = vperm.xlu0 %567, %v70
    %v569 = vpop.permute.xlu0 %568
    %570 = vset.pattern.permute.xlu0 2
    %571 = vperm.xlu0 %570, %v71
    %v572 = vpop.permute.xlu0 %571
    %573 = vset.pattern.permute.xlu0 2
    %574 = vperm.xlu0 %573, %v72
    %v575 = vpop.permute.xlu0 %574
    %576 = vset.pattern.permute.xlu0 2
    %577 = vperm.xlu0 %576, %v73
    %v578 = vpop.permute.xlu0 %577
    %579 = vset.pattern.permute.xlu0 2
    %580 = vperm.xlu0 %579, %v74
    %v581 = vpop.permute.xlu0 %580
    %582 = vset.pattern.permute.xlu0 2
    %583 = vperm.xlu0 %582, %v75
    %v584 = vpop.permute.xlu0 %583
    %585 = vset.pattern.permute.xlu0 2
    %586 = vperm.xlu0 %585, %v76
    %v587 = vpop.permute.xlu0 %586
    %588 = vset.pattern.permute.xlu0 2
    %589 = vperm.xlu0 %588, %v77
    %v590 = vpop.permute.xlu0 %589
    %vm591 = vcmp.eq.s32.totalorder %v39, %v545
    %vm592 = vcmp.eq.s32.totalorder %v39, %v548
    %vm593 = vcmp.eq.s32.totalorder %v39, %v551
    %vm594 = vcmp.eq.s32.totalorder %v39, %v554
    %vm595 = vcmp.eq.s32.totalorder %v39, %v557
    %vm596 = vcmp.eq.s32.totalorder %v39, %v560
    %vm597 = vcmp.eq.s32.totalorder %v39, %v563
    %vm598 = vcmp.eq.s32.totalorder %v39, %v566
    %vm599 = vcmp.eq.s32.totalorder %v39, %v569
    %vm600 = vcmp.eq.s32.totalorder %v39, %v572
    %vm601 = vcmp.eq.s32.totalorder %v39, %v575
    %vm602 = vcmp.eq.s32.totalorder %v39, %v578
    %vm603 = vcmp.eq.s32.totalorder %v39, %v581
    %vm604 = vcmp.eq.s32.totalorder %v39, %v584
    %vm605 = vcmp.eq.s32.totalorder %v39, %v587
    %vm606 = vcmp.eq.s32.totalorder %v39, %v590
    %v607 = vsel %vm591, 1, 0
    %v608 = vsel %vm592, 1, 0
    %v609 = vsel %vm593, 1, 0
    %v610 = vsel %vm594, 1, 0
    %v611 = vsel %vm595, 1, 0
    %v612 = vsel %vm596, 1, 0
    %v613 = vsel %vm597, 1, 0
    %v614 = vsel %vm598, 1, 0
    %v615 = vsel %vm599, 1, 0
    %v616 = vsel %vm600, 1, 0
    %v617 = vsel %vm601, 1, 0
    %v618 = vsel %vm602, 1, 0
    %v619 = vsel %vm603, 1, 0
    %v620 = vsel %vm604, 1, 0
    %v621 = vsel %vm605, 1, 0
    %v622 = vsel %vm606, 1, 0
    %v623 = vcvt.s32.f32 %v607
    %v624 = vcvt.s32.f32 %v608
    %v625 = vcvt.s32.f32 %v609
    %v626 = vcvt.s32.f32 %v610
    %v627 = vcvt.s32.f32 %v611
    %v628 = vcvt.s32.f32 %v612
    %v629 = vcvt.s32.f32 %v613
    %v630 = vcvt.s32.f32 %v614
    %v631 = vcvt.s32.f32 %v615
    %v632 = vcvt.s32.f32 %v616
    %v633 = vcvt.s32.f32 %v617
    %v634 = vcvt.s32.f32 %v618
    %v635 = vcvt.s32.f32 %v619
    %v636 = vcvt.s32.f32 %v620
    %v637 = vcvt.s32.f32 %v621
    %v638 = vcvt.s32.f32 %v622
    %639 = vset.pattern.permute.xlu0 3
    %640 = vperm.xlu0 %639, %v62
    %v641 = vpop.permute.xlu0 %640
    %642 = vset.pattern.permute.xlu0 3
    %643 = vperm.xlu0 %642, %v63
    %v644 = vpop.permute.xlu0 %643
    %645 = vset.pattern.permute.xlu0 3
    %646 = vperm.xlu0 %645, %v64
    %v647 = vpop.permute.xlu0 %646
    %648 = vset.pattern.permute.xlu0 3
    %649 = vperm.xlu0 %648, %v65
    %v650 = vpop.permute.xlu0 %649
    %651 = vset.pattern.permute.xlu0 3
    %652 = vperm.xlu0 %651, %v66
    %v653 = vpop.permute.xlu0 %652
    %654 = vset.pattern.permute.xlu0 3
    %655 = vperm.xlu0 %654, %v67
    %v656 = vpop.permute.xlu0 %655
    %657 = vset.pattern.permute.xlu0 3
    %658 = vperm.xlu0 %657, %v68
    %v659 = vpop.permute.xlu0 %658
    %660 = vset.pattern.permute.xlu0 3
    %661 = vperm.xlu0 %660, %v69
    %v662 = vpop.permute.xlu0 %661
    %663 = vset.pattern.permute.xlu0 3
    %664 = vperm.xlu0 %663, %v70
    %v665 = vpop.permute.xlu0 %664
    %666 = vset.pattern.permute.xlu0 3
    %667 = vperm.xlu0 %666, %v71
    %v668 = vpop.permute.xlu0 %667
    %669 = vset.pattern.permute.xlu0 3
    %670 = vperm.xlu0 %669, %v72
    %v671 = vpop.permute.xlu0 %670
    %672 = vset.pattern.permute.xlu0 3
    %673 = vperm.xlu0 %672, %v73
    %v674 = vpop.permute.xlu0 %673
    %675 = vset.pattern.permute.xlu0 3
    %676 = vperm.xlu0 %675, %v74
    %v677 = vpop.permute.xlu0 %676
    %678 = vset.pattern.permute.xlu0 3
    %679 = vperm.xlu0 %678, %v75
    %v680 = vpop.permute.xlu0 %679
    %681 = vset.pattern.permute.xlu0 3
    %682 = vperm.xlu0 %681, %v76
    %v683 = vpop.permute.xlu0 %682
    %684 = vset.pattern.permute.xlu0 3
    %685 = vperm.xlu0 %684, %v77
    %v686 = vpop.permute.xlu0 %685
    %vm687 = vcmp.eq.s32.totalorder %v39, %v641
    %vm688 = vcmp.eq.s32.totalorder %v39, %v644
    %vm689 = vcmp.eq.s32.totalorder %v39, %v647
    %vm690 = vcmp.eq.s32.totalorder %v39, %v650
    %vm691 = vcmp.eq.s32.totalorder %v39, %v653
    %vm692 = vcmp.eq.s32.totalorder %v39, %v656
    %vm693 = vcmp.eq.s32.totalorder %v39, %v659
    %vm694 = vcmp.eq.s32.totalorder %v39, %v662
    %vm695 = vcmp.eq.s32.totalorder %v39, %v665
    %vm696 = vcmp.eq.s32.totalorder %v39, %v668
    %vm697 = vcmp.eq.s32.totalorder %v39, %v671
    %vm698 = vcmp.eq.s32.totalorder %v39, %v674
    %vm699 = vcmp.eq.s32.totalorder %v39, %v677
    %vm700 = vcmp.eq.s32.totalorder %v39, %v680
    %vm701 = vcmp.eq.s32.totalorder %v39, %v683
    %vm702 = vcmp.eq.s32.totalorder %v39, %v686
    %v703 = vsel %vm687, 1, 0
    %v704 = vsel %vm688, 1, 0
    %v705 = vsel %vm689, 1, 0
    %v706 = vsel %vm690, 1, 0
    %v707 = vsel %vm691, 1, 0
    %v708 = vsel %vm692, 1, 0
    %v709 = vsel %vm693, 1, 0
    %v710 = vsel %vm694, 1, 0
    %v711 = vsel %vm695, 1, 0
    %v712 = vsel %vm696, 1, 0
    %v713 = vsel %vm697, 1, 0
    %v714 = vsel %vm698, 1, 0
    %v715 = vsel %vm699, 1, 0
    %v716 = vsel %vm700, 1, 0
    %v717 = vsel %vm701, 1, 0
    %v718 = vsel %vm702, 1, 0
    %v719 = vcvt.s32.f32 %v703
    %v720 = vcvt.s32.f32 %v704
    %v721 = vcvt.s32.f32 %v705
    %v722 = vcvt.s32.f32 %v706
    %v723 = vcvt.s32.f32 %v707
    %v724 = vcvt.s32.f32 %v708
    %v725 = vcvt.s32.f32 %v709
    %v726 = vcvt.s32.f32 %v710
    %v727 = vcvt.s32.f32 %v711
    %v728 = vcvt.s32.f32 %v712
    %v729 = vcvt.s32.f32 %v713
    %v730 = vcvt.s32.f32 %v714
    %v731 = vcvt.s32.f32 %v715
    %v732 = vcvt.s32.f32 %v716
    %v733 = vcvt.s32.f32 %v717
    %v734 = vcvt.s32.f32 %v718
    %v735 = vld [vmem:[#allocation5] sm:$0xff]
    %v736 = vld [vmem:[#allocation5 + $0x8] sm:$0xff]
    %v737 = vld [vmem:[#allocation5 + $0x10] sm:$0xff]
    %v738 = vld [vmem:[#allocation5 + $0x18] sm:$0xff]
    %v739 = vld [vmem:[#allocation5 + $0x20] sm:$0xff]
    %v740 = vld [vmem:[#allocation5 + $0x28] sm:$0xff]
    %v741 = vld [vmem:[#allocation5 + $0x30] sm:$0xff]
    %v742 = vld [vmem:[#allocation5 + $0x38] sm:$0xff]
    %v743 = vld [vmem:[#allocation5 + $0x40] sm:$0xff]
    %v744 = vld [vmem:[#allocation5 + $0x48] sm:$0xff]
    %v745 = vld [vmem:[#allocation5 + $0x50] sm:$0xff]
    %v746 = vld [vmem:[#allocation5 + $0x58] sm:$0xff]
    %v747 = vld [vmem:[#allocation5 + $0x60] sm:$0xff]
    %v748 = vld [vmem:[#allocation5 + $0x68] sm:$0xff]
    %v749 = vld [vmem:[#allocation5 + $0x70] sm:$0xff]
    %v750 = vld [vmem:[#allocation5 + $0x78] sm:$0xff]
    %751 = vmatprep.subr.mxu0 0.0
    %752 = vmatpush1.msra.mxu0 %v735
    %753 = vmatprep.subr.mxu0 0.0
    %754 = vmatpush1.msra.mxu0 %v736
    %755 = vmatprep.subr.mxu0 0.0
    %756 = vmatpush1.msra.mxu0 %v737
    %757 = vmatprep.subr.mxu0 0.0
    %758 = vmatpush1.msra.mxu0 %v738
    %759 = vmatprep.subr.mxu0 0.0
    %760 = vmatpush1.msra.mxu0 %v739
    %761 = vmatprep.subr.mxu0 0.0
    %762 = vmatpush1.msra.mxu0 %v740
    %763 = vmatprep.subr.mxu0 0.0
    %764 = vmatpush1.msra.mxu0 %v741
    %765 = vmatprep.subr.mxu0 0.0
    %766 = vmatpush1.msra.mxu0 %v742
    %767 = vmatprep.subr.mxu0 0.0
    %768 = vmatpush1.msra.mxu0 %v743
    %769 = vmatprep.subr.mxu0 0.0
    %770 = vmatpush1.msra.mxu0 %v744
    %771 = vmatprep.subr.mxu0 0.0
    %772 = vmatpush1.msra.mxu0 %v745
    %773 = vmatprep.subr.mxu0 0.0
    %774 = vmatpush1.msra.mxu0 %v746
    %775 = vmatprep.subr.mxu0 0.0
    %776 = vmatpush1.msra.mxu0 %v747
    %777 = vmatprep.subr.mxu0 0.0
    %778 = vmatpush1.msra.mxu0 %v748
    %779 = vmatprep.subr.mxu0 0.0
    %780 = vmatpush1.msra.mxu0 %v749
    %781 = vmatprep.subr.mxu0 0.0
    %782 = vmatpush1.msra.mxu0 %v750
    %783 = vmatprep.subr.mxu0 0.0
    %784 = vmatpush1.msra.mxu0 0.0
    %785 = vmatprep.subr.mxu0 0.0
    %786 = vmatpush1.msra.mxu0 0.0
    %787 = vmatprep.subr.mxu0 0.0
    %788 = vmatpush1.msra.mxu0 0.0
    %789 = vmatprep.subr.mxu0 0.0
    %790 = vmatpush1.msra.mxu0 0.0
    %791 = vmatprep.subr.mxu0 0.0
    %792 = vmatpush1.msra.mxu0 0.0
    %793 = vmatprep.subr.mxu0 0.0
    %794 = vmatpush1.msra.mxu0 0.0
    %795 = vmatprep.subr.mxu0 0.0
    %796 = vmatpush1.msra.mxu0 0.0
    %797 = vmatprep.subr.mxu0 0.0
    %798 = vmatpush1.msra.mxu0 0.0
    %799 = vmatprep.subr.mxu0 0.0
    %800 = vmatpush1.msra.mxu0 0.0
    %801 = vmatprep.subr.mxu0 0.0
    %802 = vmatpush1.msra.mxu0 0.0
    %803 = vmatprep.subr.mxu0 0.0
    %804 = vmatpush1.msra.mxu0 0.0
    %805 = vmatprep.subr.mxu0 0.0
    %806 = vmatpush1.msra.mxu0 0.0
    %807 = vmatprep.subr.mxu0 0.0
    %808 = vmatpush1.msra.mxu0 0.0
    %809 = vmatprep.subr.mxu0 0.0
    %810 = vmatpush1.msra.mxu0 0.0
    %811 = vmatprep.subr.mxu0 0.0
    %812 = vmatpush1.msra.mxu0 0.0
    %813 = vmatprep.subr.mxu0 0.0
    %814 = vmatpush1.msra.mxu0 0.0
    %815 = vmatprep.mubr.f32.mxu0 0.0
    %816 = vmatmul.mubr.f32.gmra.mrb[0].mxu0 %v623
    %v817 = vpop.f32.mrb[0].mxu0
    %v818 = vadd.f32 0.0, %v817
    %v819 = vpop.f32.mrb[0].mxu0
    %820 = vmatprep.mubr.f32.mxu0 0.0
    %821 = vmatmul.mubr.f32.gmra.mrb[0].mxu0 %v624
    %v822 = vpop.f32.mrb[0].mxu0
    %v823 = vadd.f32 0.0, %v822
    %v824 = vpop.f32.mrb[0].mxu0
    %825 = vmatprep.mubr.f32.mxu0 0.0
    %826 = vmatmul.mubr.f32.gmra.mrb[0].mxu0 %v625
    %v827 = vpop.f32.mrb[0].mxu0
    %v828 = vadd.f32 0.0, %v827
    %v829 = vpop.f32.mrb[0].mxu0
    %830 = vmatprep.mubr.f32.mxu0 0.0
    %831 = vmatmul.mubr.f32.gmra.mrb[0].mxu0 %v626
    %v832 = vpop.f32.mrb[0].mxu0
    %v833 = vadd.f32 0.0, %v832
    %v834 = vpop.f32.mrb[0].mxu0
    %835 = vmatprep.mubr.f32.mxu0 0.0
    %836 = vmatmul.mubr.f32.gmra.mrb[0].mxu0 %v627
    %v837 = vpop.f32.mrb[0].mxu0
    %v838 = vadd.f32 0.0, %v837
    %v839 = vpop.f32.mrb[0].mxu0
    %840 = vmatprep.mubr.f32.mxu0 0.0
    %841 = vmatmul.mubr.f32.gmra.mrb[0].mxu0 %v628
    %v842 = vpop.f32.mrb[0].mxu0
    %v843 = vadd.f32 0.0, %v842
    %v844 = vpop.f32.mrb[0].mxu0
    %845 = vmatprep.mubr.f32.mxu0 0.0
    %846 = vmatmul.mubr.f32.gmra.mrb[0].mxu0 %v629
    %v847 = vpop.f32.mrb[0].mxu0
    %v848 = vadd.f32 0.0, %v847
    %v849 = vpop.f32.mrb[0].mxu0
    %850 = vmatprep.mubr.f32.mxu0 0.0
    %851 = vmatmul.mubr.f32.gmra.mrb[0].mxu0 %v630
    %v852 = vpop.f32.mrb[0].mxu0
    %v853 = vadd.f32 0.0, %v852
    %v854 = vpop.f32.mrb[0].mxu0
    %855 = vmatprep.mubr.f32.mxu0 0.0
    %856 = vmatmul.mubr.f32.gmra.mrb[0].mxu0 %v631
    %v857 = vpop.f32.mrb[0].mxu0
    %v858 = vadd.f32 0.0, %v857
    %v859 = vpop.f32.mrb[0].mxu0
    %860 = vmatprep.mubr.f32.mxu0 0.0
    %861 = vmatmul.mubr.f32.gmra.mrb[0].mxu0 %v632
    %v862 = vpop.f32.mrb[0].mxu0
    %v863 = vadd.f32 0.0, %v862
    %v864 = vpop.f32.mrb[0].mxu0
    %865 = vmatprep.mubr.f32.mxu0 0.0
    %866 = vmatmul.mubr.f32.gmra.mrb[0].mxu0 %v633
    %v867 = vpop.f32.mrb[0].mxu0
    %v868 = vadd.f32 0.0, %v867
    %v869 = vpop.f32.mrb[0].mxu0
    %870 = vmatprep.mubr.f32.mxu0 0.0
    %871 = vmatmul.mubr.f32.gmra.mrb[0].mxu0 %v634
    %v872 = vpop.f32.mrb[0].mxu0
    %v873 = vadd.f32 0.0, %v872
    %v874 = vpop.f32.mrb[0].mxu0
    %875 = vmatprep.mubr.f32.mxu0 0.0
    %876 = vmatmul.mubr.f32.gmra.mrb[0].mxu0 %v635
    %v877 = vpop.f32.mrb[0].mxu0
    %v878 = vadd.f32 0.0, %v877
    %v879 = vpop.f32.mrb[0].mxu0
    %880 = vmatprep.mubr.f32.mxu0 0.0
    %881 = vmatmul.mubr.f32.gmra.mrb[0].mxu0 %v636
    %v882 = vpop.f32.mrb[0].mxu0
    %v883 = vadd.f32 0.0, %v882
    %v884 = vpop.f32.mrb[0].mxu0
    %885 = vmatprep.mubr.f32.mxu0 0.0
    %886 = vmatmul.mubr.f32.gmra.mrb[0].mxu0 %v637
    %v887 = vpop.f32.mrb[0].mxu0
    %v888 = vadd.f32 0.0, %v887
    %v889 = vpop.f32.mrb[0].mxu0
    %890 = vmatprep.mubr.f32.mxu0 0.0
    %891 = vmatmul.mubr.f32.gmra.mrb[0].mxu0 %v638
    %v892 = vpop.f32.mrb[0].mxu0
    %v893 = vadd.f32 0.0, %v892
    %v894 = vpop.f32.mrb[0].mxu0
    %895 = vmatprep.mubr.f32.mxu0 0.0
    %896 = vmatmul.mubr.f32.gmra.mrb[0].mxu0 %v719
    %v897 = vpop.f32.mrb[0].mxu0
    %v898 = vadd.f32 0.0, %v897
    %v899 = vpop.f32.mrb[0].mxu0
    %900 = vmatprep.mubr.f32.mxu0 0.0
    %901 = vmatmul.mubr.f32.gmra.mrb[0].mxu0 %v720
    %v902 = vpop.f32.mrb[0].mxu0
    %v903 = vadd.f32 0.0, %v902
    %v904 = vpop.f32.mrb[0].mxu0
    %905 = vmatprep.mubr.f32.mxu0 0.0
    %906 = vmatmul.mubr.f32.gmra.mrb[0].mxu0 %v721
    %v907 = vpop.f32.mrb[0].mxu0
    %v908 = vadd.f32 0.0, %v907
    %v909 = vpop.f32.mrb[0].mxu0
    %910 = vmatprep.mubr.f32.mxu0 0.0
    %911 = vmatmul.mubr.f32.gmra.mrb[0].mxu0 %v722
    %v912 = vpop.f32.mrb[0].mxu0
    %v913 = vadd.f32 0.0, %v912
    %v914 = vpop.f32.mrb[0].mxu0
    %915 = vmatprep.mubr.f32.mxu0 0.0
    %916 = vmatmul.mubr.f32.gmra.mrb[0].mxu0 %v723
    %v917 = vpop.f32.mrb[0].mxu0
    %v918 = vadd.f32 0.0, %v917
    %v919 = vpop.f32.mrb[0].mxu0
    %920 = vmatprep.mubr.f32.mxu0 0.0
    %921 = vmatmul.mubr.f32.gmra.mrb[0].mxu0 %v724
    %v922 = vpop.f32.mrb[0].mxu0
    %v923 = vadd.f32 0.0, %v922
    %v924 = vpop.f32.mrb[0].mxu0
    %925 = vmatprep.mubr.f32.mxu0 0.0
    %926 = vmatmul.mubr.f32.gmra.mrb[0].mxu0 %v725
    %v927 = vpop.f32.mrb[0].mxu0
    %v928 = vadd.f32 0.0, %v927
    %v929 = vpop.f32.mrb[0].mxu0
    %930 = vmatprep.mubr.f32.mxu0 0.0
    %931 = vmatmul.mubr.f32.gmra.mrb[0].mxu0 %v726
    %v932 = vpop.f32.mrb[0].mxu0
    %v933 = vadd.f32 0.0, %v932
    %v934 = vpop.f32.mrb[0].mxu0
    %935 = vmatprep.mubr.f32.mxu0 0.0
    %936 = vmatmul.mubr.f32.gmra.mrb[0].mxu0 %v727
    %v937 = vpop.f32.mrb[0].mxu0
    %v938 = vadd.f32 0.0, %v937
    %v939 = vpop.f32.mrb[0].mxu0
    %940 = vmatprep.mubr.f32.mxu0 0.0
    %941 = vmatmul.mubr.f32.gmra.mrb[0].mxu0 %v728
    %v942 = vpop.f32.mrb[0].mxu0
    %v943 = vadd.f32 0.0, %v942
    %v944 = vpop.f32.mrb[0].mxu0
    %945 = vmatprep.mubr.f32.mxu0 0.0
    %946 = vmatmul.mubr.f32.gmra.mrb[0].mxu0 %v729
    %v947 = vpop.f32.mrb[0].mxu0
    %v948 = vadd.f32 0.0, %v947
    %v949 = vpop.f32.mrb[0].mxu0
    %950 = vmatprep.mubr.f32.mxu0 0.0
    %951 = vmatmul.mubr.f32.gmra.mrb[0].mxu0 %v730
    %v952 = vpop.f32.mrb[0].mxu0
    %v953 = vadd.f32 0.0, %v952
    %v954 = vpop.f32.mrb[0].mxu0
    %955 = vmatprep.mubr.f32.mxu0 0.0
    %956 = vmatmul.mubr.f32.gmra.mrb[0].mxu0 %v731
    %v957 = vpop.f32.mrb[0].mxu0
    %v958 = vadd.f32 0.0, %v957
    %v959 = vpop.f32.mrb[0].mxu0
    %960 = vmatprep.mubr.f32.mxu0 0.0
    %961 = vmatmul.mubr.f32.gmra.mrb[0].mxu0 %v732
    %v962 = vpop.f32.mrb[0].mxu0
    %v963 = vadd.f32 0.0, %v962
    %v964 = vpop.f32.mrb[0].mxu0
    %965 = vmatprep.mubr.f32.mxu0 0.0
    %966 = vmatmul.mubr.f32.gmra.mrb[0].mxu0 %v733
    %v967 = vpop.f32.mrb[0].mxu0
    %v968 = vadd.f32 0.0, %v967
    %v969 = vpop.f32.mrb[0].mxu0
    %970 = vmatprep.mubr.f32.mxu0 0.0
    %971 = vmatmul.mubr.f32.gmra.mrb[0].mxu0 %v734
    %v972 = vpop.f32.mrb[0].mxu0
    %v973 = vadd.f32 0.0, %v972
    %v974 = vpop.f32.mrb[0].mxu0
    %975 = vdwg.mxu0
    %s976 = sadd.s32 0, 256
    %s977 = scalar_lea.vmem [#allocation7], %s976
    %978 = vst [vmem:[%s977] sm:$0xff] %v818
    %979 = vst [vmem:[%s977 + $0x8] sm:$0xff] %v823
    %980 = vst [vmem:[%s977 + $0x10] sm:$0xff] %v828
    %981 = vst [vmem:[%s977 + $0x18] sm:$0xff] %v833
    %982 = vst [vmem:[%s977 + $0x20] sm:$0xff] %v838
    %983 = vst [vmem:[%s977 + $0x28] sm:$0xff] %v843
    %984 = vst [vmem:[%s977 + $0x30] sm:$0xff] %v848
    %985 = vst [vmem:[%s977 + $0x38] sm:$0xff] %v853
    %986 = vst [vmem:[%s977 + $0x40] sm:$0xff] %v858
    %987 = vst [vmem:[%s977 + $0x48] sm:$0xff] %v863
    %988 = vst [vmem:[%s977 + $0x50] sm:$0xff] %v868
    %989 = vst [vmem:[%s977 + $0x58] sm:$0xff] %v873
    %990 = vst [vmem:[%s977 + $0x60] sm:$0xff] %v878
    %991 = vst [vmem:[%s977 + $0x68] sm:$0xff] %v883
    %992 = vst [vmem:[%s977 + $0x70] sm:$0xff] %v888
    %993 = vst [vmem:[%s977 + $0x78] sm:$0xff] %v893
    %994 = vst [vmem:[%s977 + $0x80] sm:$0xff] %v898
    %995 = vst [vmem:[%s977 + $0x88] sm:$0xff] %v903
    %996 = vst [vmem:[%s977 + $0x90] sm:$0xff] %v908
    %997 = vst [vmem:[%s977 + $0x98] sm:$0xff] %v913
    %998 = vst [vmem:[%s977 + $0xa0] sm:$0xff] %v918
    %999 = vst [vmem:[%s977 + $0xa8] sm:$0xff] %v923
    %1000 = vst [vmem:[%s977 + $0xb0] sm:$0xff] %v928
    %1001 = vst [vmem:[%s977 + $0xb8] sm:$0xff] %v933
    %1002 = vst [vmem:[%s977 + $0xc0] sm:$0xff] %v938
    %1003 = vst [vmem:[%s977 + $0xc8] sm:$0xff] %v943
    %1004 = vst [vmem:[%s977 + $0xd0] sm:$0xff] %v948
    %1005 = vst [vmem:[%s977 + $0xd8] sm:$0xff] %v953
    %1006 = vst [vmem:[%s977 + $0xe0] sm:$0xff] %v958
    %1007 = vst [vmem:[%s977 + $0xe8] sm:$0xff] %v963
    %1008 = vst [vmem:[%s977 + $0xf0] sm:$0xff] %v968
    %1009 = vst [vmem:[%s977 + $0xf8] sm:$0xff] %v973
    %1010 = vset.pattern.permute.xlu0 4
    %1011 = vperm.xlu0 %1010, %v62
    %v1012 = vpop.permute.xlu0 %1011
    %1013 = vset.pattern.permute.xlu0 4
    %1014 = vperm.xlu0 %1013, %v63
    %v1015 = vpop.permute.xlu0 %1014
    %1016 = vset.pattern.permute.xlu0 4
    %1017 = vperm.xlu0 %1016, %v64
    %v1018 = vpop.permute.xlu0 %1017
    %1019 = vset.pattern.permute.xlu0 4
    %1020 = vperm.xlu0 %1019, %v65
    %v1021 = vpop.permute.xlu0 %1020
    %1022 = vset.pattern.permute.xlu0 4
    %1023 = vperm.xlu0 %1022, %v66
    %v1024 = vpop.permute.xlu0 %1023
    %1025 = vset.pattern.permute.xlu0 4
    %1026 = vperm.xlu0 %1025, %v67
    %v1027 = vpop.permute.xlu0 %1026
    %1028 = vset.pattern.permute.xlu0 4
    %1029 = vperm.xlu0 %1028, %v68
    %v1030 = vpop.permute.xlu0 %1029
    %1031 = vset.pattern.permute.xlu0 4
    %1032 = vperm.xlu0 %1031, %v69
    %v1033 = vpop.permute.xlu0 %1032
    %1034 = vset.pattern.permute.xlu0 4
    %1035 = vperm.xlu0 %1034, %v70
    %v1036 = vpop.permute.xlu0 %1035
    %1037 = vset.pattern.permute.xlu0 4
    %1038 = vperm.xlu0 %1037, %v71
    %v1039 = vpop.permute.xlu0 %1038
    %1040 = vset.pattern.permute.xlu0 4
    %1041 = vperm.xlu0 %1040, %v72
    %v1042 = vpop.permute.xlu0 %1041
    %1043 = vset.pattern.permute.xlu0 4
    %1044 = vperm.xlu0 %1043, %v73
    %v1045 = vpop.permute.xlu0 %1044
    %1046 = vset.pattern.permute.xlu0 4
    %1047 = vperm.xlu0 %1046, %v74
    %v1048 = vpop.permute.xlu0 %1047
    %1049 = vset.pattern.permute.xlu0 4
    %1050 = vperm.xlu0 %1049, %v75
    %v1051 = vpop.permute.xlu0 %1050
    %1052 = vset.pattern.permute.xlu0 4
    %1053 = vperm.xlu0 %1052, %v76
    %v1054 = vpop.permute.xlu0 %1053
    %1055 = vset.pattern.permute.xlu0 4
    %1056 = vperm.xlu0 %1055, %v77
    %v1057 = vpop.permute.xlu0 %1056
    %vm1058 = vcmp.eq.s32.totalorder %v39, %v1012
    %vm1059 = vcmp.eq.s32.totalorder %v39, %v1015
    %vm1060 = vcmp.eq.s32.totalorder %v39, %v1018
    %vm1061 = vcmp.eq.s32.totalorder %v39, %v1021
    %vm1062 = vcmp.eq.s32.totalorder %v39, %v1024
    %vm1063 = vcmp.eq.s32.totalorder %v39, %v1027
    %vm1064 = vcmp.eq.s32.totalorder %v39, %v1030
    %vm1065 = vcmp.eq.s32.totalorder %v39, %v1033
    %vm1066 = vcmp.eq.s32.totalorder %v39, %v1036
    %vm1067 = vcmp.eq.s32.totalorder %v39, %v1039
    %vm1068 = vcmp.eq.s32.totalorder %v39, %v1042
    %vm1069 = vcmp.eq.s32.totalorder %v39, %v1045
    %vm1070 = vcmp.eq.s32.totalorder %v39, %v1048
    %vm1071 = vcmp.eq.s32.totalorder %v39, %v1051
    %vm1072 = vcmp.eq.s32.totalorder %v39, %v1054
    %vm1073 = vcmp.eq.s32.totalorder %v39, %v1057
    %v1074 = vsel %vm1058, 1, 0
    %v1075 = vsel %vm1059, 1, 0
    %v1076 = vsel %vm1060, 1, 0
    %v1077 = vsel %vm1061, 1, 0
    %v1078 = vsel %vm1062, 1, 0
    %v1079 = vsel %vm1063, 1, 0
    %v1080 = vsel %vm1064, 1, 0
    %v1081 = vsel %vm1065, 1, 0
    %v1082 = vsel %vm1066, 1, 0
    %v1083 = vsel %vm1067, 1, 0
    %v1084 = vsel %vm1068, 1, 0
    %v1085 = vsel %vm1069, 1, 0
    %v1086 = vsel %vm1070, 1, 0
    %v1087 = vsel %vm1071, 1, 0
    %v1088 = vsel %vm1072, 1, 0
    %v1089 = vsel %vm1073, 1, 0
    %v1090 = vcvt.s32.f32 %v1074
    %v1091 = vcvt.s32.f32 %v1075
    %v1092 = vcvt.s32.f32 %v1076
    %v1093 = vcvt.s32.f32 %v1077
    %v1094 = vcvt.s32.f32 %v1078
    %v1095 = vcvt.s32.f32 %v1079
    %v1096 = vcvt.s32.f32 %v1080
    %v1097 = vcvt.s32.f32 %v1081
    %v1098 = vcvt.s32.f32 %v1082
    %v1099 = vcvt.s32.f32 %v1083
    %v1100 = vcvt.s32.f32 %v1084
    %v1101 = vcvt.s32.f32 %v1085
    %v1102 = vcvt.s32.f32 %v1086
    %v1103 = vcvt.s32.f32 %v1087
    %v1104 = vcvt.s32.f32 %v1088
    %v1105 = vcvt.s32.f32 %v1089
    %1106 = vset.pattern.permute.xlu0 5
    %1107 = vperm.xlu0 %1106, %v62
    %v1108 = vpop.permute.xlu0 %1107
    %1109 = vset.pattern.permute.xlu0 5
    %1110 = vperm.xlu0 %1109, %v63
    %v1111 = vpop.permute.xlu0 %1110
    %1112 = vset.pattern.permute.xlu0 5
    %1113 = vperm.xlu0 %1112, %v64
    %v1114 = vpop.permute.xlu0 %1113
    %1115 = vset.pattern.permute.xlu0 5
    %1116 = vperm.xlu0 %1115, %v65
    %v1117 = vpop.permute.xlu0 %1116
    %1118 = vset.pattern.permute.xlu0 5
    %1119 = vperm.xlu0 %1118, %v66
    %v1120 = vpop.permute.xlu0 %1119
    %1121 = vset.pattern.permute.xlu0 5
    %1122 = vperm.xlu0 %1121, %v67
    %v1123 = vpop.permute.xlu0 %1122
    %1124 = vset.pattern.permute.xlu0 5
    %1125 = vperm.xlu0 %1124, %v68
    %v1126 = vpop.permute.xlu0 %1125
    %1127 = vset.pattern.permute.xlu0 5
    %1128 = vperm.xlu0 %1127, %v69
    %v1129 = vpop.permute.xlu0 %1128
    %1130 = vset.pattern.permute.xlu0 5
    %1131 = vperm.xlu0 %1130, %v70
    %v1132 = vpop.permute.xlu0 %1131
    %1133 = vset.pattern.permute.xlu0 5
    %1134 = vperm.xlu0 %1133, %v71
    %v1135 = vpop.permute.xlu0 %1134
    %1136 = vset.pattern.permute.xlu0 5
    %1137 = vperm.xlu0 %1136, %v72
    %v1138 = vpop.permute.xlu0 %1137
    %1139 = vset.pattern.permute.xlu0 5
    %1140 = vperm.xlu0 %1139, %v73
    %v1141 = vpop.permute.xlu0 %1140
    %1142 = vset.pattern.permute.xlu0 5
    %1143 = vperm.xlu0 %1142, %v74
    %v1144 = vpop.permute.xlu0 %1143
    %1145 = vset.pattern.permute.xlu0 5
    %1146 = vperm.xlu0 %1145, %v75
    %v1147 = vpop.permute.xlu0 %1146
    %1148 = vset.pattern.permute.xlu0 5
    %1149 = vperm.xlu0 %1148, %v76
    %v1150 = vpop.permute.xlu0 %1149
    %1151 = vset.pattern.permute.xlu0 5
    %1152 = vperm.xlu0 %1151, %v77
    %v1153 = vpop.permute.xlu0 %1152
    %vm1154 = vcmp.eq.s32.totalorder %v39, %v1108
    %vm1155 = vcmp.eq.s32.totalorder %v39, %v1111
    %vm1156 = vcmp.eq.s32.totalorder %v39, %v1114
    %vm1157 = vcmp.eq.s32.totalorder %v39, %v1117
    %vm1158 = vcmp.eq.s32.totalorder %v39, %v1120
    %vm1159 = vcmp.eq.s32.totalorder %v39, %v1123
    %vm1160 = vcmp.eq.s32.totalorder %v39, %v1126
    %vm1161 = vcmp.eq.s32.totalorder %v39, %v1129
    %vm1162 = vcmp.eq.s32.totalorder %v39, %v1132
    %vm1163 = vcmp.eq.s32.totalorder %v39, %v1135
    %vm1164 = vcmp.eq.s32.totalorder %v39, %v1138
    %vm1165 = vcmp.eq.s32.totalorder %v39, %v1141
    %vm1166 = vcmp.eq.s32.totalorder %v39, %v1144
    %vm1167 = vcmp.eq.s32.totalorder %v39, %v1147
    %vm1168 = vcmp.eq.s32.totalorder %v39, %v1150
    %vm1169 = vcmp.eq.s32.totalorder %v39, %v1153
    %v1170 = vsel %vm1154, 1, 0
    %v1171 = vsel %vm1155, 1, 0
    %v1172 = vsel %vm1156, 1, 0
    %v1173 = vsel %vm1157, 1, 0
    %v1174 = vsel %vm1158, 1, 0
    %v1175 = vsel %vm1159, 1, 0
    %v1176 = vsel %vm1160, 1, 0
    %v1177 = vsel %vm1161, 1, 0
    %v1178 = vsel %vm1162, 1, 0
    %v1179 = vsel %vm1163, 1, 0
    %v1180 = vsel %vm1164, 1, 0
    %v1181 = vsel %vm1165, 1, 0
    %v1182 = vsel %vm1166, 1, 0
    %v1183 = vsel %vm1167, 1, 0
    %v1184 = vsel %vm1168, 1, 0
    %v1185 = vsel %vm1169, 1, 0
    %v1186 = vcvt.s32.f32 %v1170
    %v1187 = vcvt.s32.f32 %v1171
    %v1188 = vcvt.s32.f32 %v1172
    %v1189 = vcvt.s32.f32 %v1173
    %v1190 = vcvt.s32.f32 %v1174
    %v1191 = vcvt.s32.f32 %v1175
    %v1192 = vcvt.s32.f32 %v1176
    %v1193 = vcvt.s32.f32 %v1177
    %v1194 = vcvt.s32.f32 %v1178
    %v1195 = vcvt.s32.f32 %v1179
    %v1196 = vcvt.s32.f32 %v1180
    %v1197 = vcvt.s32.f32 %v1181
    %v1198 = vcvt.s32.f32 %v1182
    %v1199 = vcvt.s32.f32 %v1183
    %v1200 = vcvt.s32.f32 %v1184
    %v1201 = vcvt.s32.f32 %v1185
    %v1202 = vld [vmem:[#allocation5] sm:$0xff]
    %v1203 = vld [vmem:[#allocation5 + $0x8] sm:$0xff]
    %v1204 = vld [vmem:[#allocation5 + $0x10] sm:$0xff]
    %v1205 = vld [vmem:[#allocation5 + $0x18] sm:$0xff]
    %v1206 = vld [vmem:[#allocation5 + $0x20] sm:$0xff]
    %v1207 = vld [vmem:[#allocation5 + $0x28] sm:$0xff]
    %v1208 = vld [vmem:[#allocation5 + $0x30] sm:$0xff]
    %v1209 = vld [vmem:[#allocation5 + $0x38] sm:$0xff]
    %v1210 = vld [vmem:[#allocation5 + $0x40] sm:$0xff]
    %v1211 = vld [vmem:[#allocation5 + $0x48] sm:$0xff]
    %v1212 = vld [vmem:[#allocation5 + $0x50] sm:$0xff]
    %v1213 = vld [vmem:[#allocation5 + $0x58] sm:$0xff]
    %v1214 = vld [vmem:[#allocation5 + $0x60] sm:$0xff]
    %v1215 = vld [vmem:[#allocation5 + $0x68] sm:$0xff]
    %v1216 = vld [vmem:[#allocation5 + $0x70] sm:$0xff]
    %v1217 = vld [vmem:[#allocation5 + $0x78] sm:$0xff]
    %1218 = vmatprep.subr.mxu0 0.0
    %1219 = vmatpush1.msra.mxu0 %v1202
    %1220 = vmatprep.subr.mxu0 0.0
    %1221 = vmatpush1.msra.mxu0 %v1203
    %1222 = vmatprep.subr.mxu0 0.0
    %1223 = vmatpush1.msra.mxu0 %v1204
    %1224 = vmatprep.subr.mxu0 0.0
    %1225 = vmatpush1.msra.mxu0 %v1205
    %1226 = vmatprep.subr.mxu0 0.0
    %1227 = vmatpush1.msra.mxu0 %v1206
    %1228 = vmatprep.subr.mxu0 0.0
    %1229 = vmatpush1.msra.mxu0 %v1207
    %1230 = vmatprep.subr.mxu0 0.0
    %1231 = vmatpush1.msra.mxu0 %v1208
    %1232 = vmatprep.subr.mxu0 0.0
    %1233 = vmatpush1.msra.mxu0 %v1209
    %1234 = vmatprep.subr.mxu0 0.0
    %1235 = vmatpush1.msra.mxu0 %v1210
    %1236 = vmatprep.subr.mxu0 0.0
    %1237 = vmatpush1.msra.mxu0 %v1211
    %1238 = vmatprep.subr.mxu0 0.0
    %1239 = vmatpush1.msra.mxu0 %v1212
    %1240 = vmatprep.subr.mxu0 0.0
    %1241 = vmatpush1.msra.mxu0 %v1213
    %1242 = vmatprep.subr.mxu0 0.0
    %1243 = vmatpush1.msra.mxu0 %v1214
    %1244 = vmatprep.subr.mxu0 0.0
    %1245 = vmatpush1.msra.mxu0 %v1215
    %1246 = vmatprep.subr.mxu0 0.0
    %1247 = vmatpush1.msra.mxu0 %v1216
    %1248 = vmatprep.subr.mxu0 0.0
    %1249 = vmatpush1.msra.mxu0 %v1217
    %1250 = vmatprep.subr.mxu0 0.0
    %1251 = vmatpush1.msra.mxu0 0.0
    %1252 = vmatprep.subr.mxu0 0.0
    %1253 = vmatpush1.msra.mxu0 0.0
    %1254 = vmatprep.subr.mxu0 0.0
    %1255 = vmatpush1.msra.mxu0 0.0
    %1256 = vmatprep.subr.mxu0 0.0
    %1257 = vmatpush1.msra.mxu0 0.0
    %1258 = vmatprep.subr.mxu0 0.0
    %1259 = vmatpush1.msra.mxu0 0.0
    %1260 = vmatprep.subr.mxu0 0.0
    %1261 = vmatpush1.msra.mxu0 0.0
    %1262 = vmatprep.subr.mxu0 0.0
    %1263 = vmatpush1.msra.mxu0 0.0
    %1264 = vmatprep.subr.mxu0 0.0
    %1265 = vmatpush1.msra.mxu0 0.0
    %1266 = vmatprep.subr.mxu0 0.0
    %1267 = vmatpush1.msra.mxu0 0.0
    %1268 = vmatprep.subr.mxu0 0.0
    %1269 = vmatpush1.msra.mxu0 0.0
    %1270 = vmatprep.subr.mxu0 0.0
    %1271 = vmatpush1.msra.mxu0 0.0
    %1272 = vmatprep.subr.mxu0 0.0
    %1273 = vmatpush1.msra.mxu0 0.0
    %1274 = vmatprep.subr.mxu0 0.0
    %1275 = vmatpush1.msra.mxu0 0.0
    %1276 = vmatprep.subr.mxu0 0.0
    %1277 = vmatpush1.msra.mxu0 0.0
    %1278 = vmatprep.subr.mxu0 0.0
    %1279 = vmatpush1.msra.mxu0 0.0
    %1280 = vmatprep.subr.mxu0 0.0
    %1281 = vmatpush1.msra.mxu0 0.0
    %1282 = vmatprep.mubr.f32.mxu0 0.0
    %1283 = vmatmul.mubr.f32.gmra.mrb[0].mxu0 %v1090
    %v1284 = vpop.f32.mrb[0].mxu0
    %v1285 = vadd.f32 0.0, %v1284
    %v1286 = vpop.f32.mrb[0].mxu0
    %1287 = vmatprep.mubr.f32.mxu0 0.0
    %1288 = vmatmul.mubr.f32.gmra.mrb[0].mxu0 %v1091
    %v1289 = vpop.f32.mrb[0].mxu0
    %v1290 = vadd.f32 0.0, %v1289
    %v1291 = vpop.f32.mrb[0].mxu0
    %1292 = vmatprep.mubr.f32.mxu0 0.0
    %1293 = vmatmul.mubr.f32.gmra.mrb[0].mxu0 %v1092
    %v1294 = vpop.f32.mrb[0].mxu0
    %v1295 = vadd.f32 0.0, %v1294
    %v1296 = vpop.f32.mrb[0].mxu0
    %1297 = vmatprep.mubr.f32.mxu0 0.0
    %1298 = vmatmul.mubr.f32.gmra.mrb[0].mxu0 %v1093
    %v1299 = vpop.f32.mrb[0].mxu0
    %v1300 = vadd.f32 0.0, %v1299
    %v1301 = vpop.f32.mrb[0].mxu0
    %1302 = vmatprep.mubr.f32.mxu0 0.0
    %1303 = vmatmul.mubr.f32.gmra.mrb[0].mxu0 %v1094
    %v1304 = vpop.f32.mrb[0].mxu0
    %v1305 = vadd.f32 0.0, %v1304
    %v1306 = vpop.f32.mrb[0].mxu0
    %1307 = vmatprep.mubr.f32.mxu0 0.0
    %1308 = vmatmul.mubr.f32.gmra.mrb[0].mxu0 %v1095
    %v1309 = vpop.f32.mrb[0].mxu0
    %v1310 = vadd.f32 0.0, %v1309
    %v1311 = vpop.f32.mrb[0].mxu0
    %1312 = vmatprep.mubr.f32.mxu0 0.0
    %1313 = vmatmul.mubr.f32.gmra.mrb[0].mxu0 %v1096
    %v1314 = vpop.f32.mrb[0].mxu0
    %v1315 = vadd.f32 0.0, %v1314
    %v1316 = vpop.f32.mrb[0].mxu0
    %1317 = vmatprep.mubr.f32.mxu0 0.0
    %1318 = vmatmul.mubr.f32.gmra.mrb[0].mxu0 %v1097
    %v1319 = vpop.f32.mrb[0].mxu0
    %v1320 = vadd.f32 0.0, %v1319
    %v1321 = vpop.f32.mrb[0].mxu0
    %1322 = vmatprep.mubr.f32.mxu0 0.0
    %1323 = vmatmul.mubr.f32.gmra.mrb[0].mxu0 %v1098
    %v1324 = vpop.f32.mrb[0].mxu0
    %v1325 = vadd.f32 0.0, %v1324
    %v1326 = vpop.f32.mrb[0].mxu0
    %1327 = vmatprep.mubr.f32.mxu0 0.0
    %1328 = vmatmul.mubr.f32.gmra.mrb[0].mxu0 %v1099
    %v1329 = vpop.f32.mrb[0].mxu0
    %v1330 = vadd.f32 0.0, %v1329
    %v1331 = vpop.f32.mrb[0].mxu0
    %1332 = vmatprep.mubr.f32.mxu0 0.0
    %1333 = vmatmul.mubr.f32.gmra.mrb[0].mxu0 %v1100
    %v1334 = vpop.f32.mrb[0].mxu0
    %v1335 = vadd.f32 0.0, %v1334
    %v1336 = vpop.f32.mrb[0].mxu0
    %1337 = vmatprep.mubr.f32.mxu0 0.0
    %1338 = vmatmul.mubr.f32.gmra.mrb[0].mxu0 %v1101
    %v1339 = vpop.f32.mrb[0].mxu0
    %v1340 = vadd.f32 0.0, %v1339
    %v1341 = vpop.f32.mrb[0].mxu0
    %1342 = vmatprep.mubr.f32.mxu0 0.0
    %1343 = vmatmul.mubr.f32.gmra.mrb[0].mxu0 %v1102
    %v1344 = vpop.f32.mrb[0].mxu0
    %v1345 = vadd.f32 0.0, %v1344
    %v1346 = vpop.f32.mrb[0].mxu0
    %1347 = vmatprep.mubr.f32.mxu0 0.0
    %1348 = vmatmul.mubr.f32.gmra.mrb[0].mxu0 %v1103
    %v1349 = vpop.f32.mrb[0].mxu0
    %v1350 = vadd.f32 0.0, %v1349
    %v1351 = vpop.f32.mrb[0].mxu0
    %1352 = vmatprep.mubr.f32.mxu0 0.0
    %1353 = vmatmul.mubr.f32.gmra.mrb[0].mxu0 %v1104
    %v1354 = vpop.f32.mrb[0].mxu0
    %v1355 = vadd.f32 0.0, %v1354
    %v1356 = vpop.f32.mrb[0].mxu0
    %1357 = vmatprep.mubr.f32.mxu0 0.0
    %1358 = vmatmul.mubr.f32.gmra.mrb[0].mxu0 %v1105
    %v1359 = vpop.f32.mrb[0].mxu0
    %v1360 = vadd.f32 0.0, %v1359
    %v1361 = vpop.f32.mrb[0].mxu0
    %1362 = vmatprep.mubr.f32.mxu0 0.0
    %1363 = vmatmul.mubr.f32.gmra.mrb[0].mxu0 %v1186
    %v1364 = vpop.f32.mrb[0].mxu0
    %v1365 = vadd.f32 0.0, %v1364
    %v1366 = vpop.f32.mrb[0].mxu0
    %1367 = vmatprep.mubr.f32.mxu0 0.0
    %1368 = vmatmul.mubr.f32.gmra.mrb[0].mxu0 %v1187
    %v1369 = vpop.f32.mrb[0].mxu0
    %v1370 = vadd.f32 0.0, %v1369
    %v1371 = vpop.f32.mrb[0].mxu0
    %1372 = vmatprep.mubr.f32.mxu0 0.0
    %1373 = vmatmul.mubr.f32.gmra.mrb[0].mxu0 %v1188
    %v1374 = vpop.f32.mrb[0].mxu0
    %v1375 = vadd.f32 0.0, %v1374
    %v1376 = vpop.f32.mrb[0].mxu0
    %1377 = vmatprep.mubr.f32.mxu0 0.0
    %1378 = vmatmul.mubr.f32.gmra.mrb[0].mxu0 %v1189
    %v1379 = vpop.f32.mrb[0].mxu0
    %v1380 = vadd.f32 0.0, %v1379
    %v1381 = vpop.f32.mrb[0].mxu0
    %1382 = vmatprep.mubr.f32.mxu0 0.0
    %1383 = vmatmul.mubr.f32.gmra.mrb[0].mxu0 %v1190
    %v1384 = vpop.f32.mrb[0].mxu0
    %v1385 = vadd.f32 0.0, %v1384
    %v1386 = vpop.f32.mrb[0].mxu0
    %1387 = vmatprep.mubr.f32.mxu0 0.0
    %1388 = vmatmul.mubr.f32.gmra.mrb[0].mxu0 %v1191
    %v1389 = vpop.f32.mrb[0].mxu0
    %v1390 = vadd.f32 0.0, %v1389
    %v1391 = vpop.f32.mrb[0].mxu0
    %1392 = vmatprep.mubr.f32.mxu0 0.0
    %1393 = vmatmul.mubr.f32.gmra.mrb[0].mxu0 %v1192
    %v1394 = vpop.f32.mrb[0].mxu0
    %v1395 = vadd.f32 0.0, %v1394
    %v1396 = vpop.f32.mrb[0].mxu0
    %1397 = vmatprep.mubr.f32.mxu0 0.0
    %1398 = vmatmul.mubr.f32.gmra.mrb[0].mxu0 %v1193
    %v1399 = vpop.f32.mrb[0].mxu0
    %v1400 = vadd.f32 0.0, %v1399
    %v1401 = vpop.f32.mrb[0].mxu0
    %1402 = vmatprep.mubr.f32.mxu0 0.0
    %1403 = vmatmul.mubr.f32.gmra.mrb[0].mxu0 %v1194
    %v1404 = vpop.f32.mrb[0].mxu0
    %v1405 = vadd.f32 0.0, %v1404
    %v1406 = vpop.f32.mrb[0].mxu0
    %1407 = vmatprep.mubr.f32.mxu0 0.0
    %1408 = vmatmul.mubr.f32.gmra.mrb[0].mxu0 %v1195
    %v1409 = vpop.f32.mrb[0].mxu0
    %v1410 = vadd.f32 0.0, %v1409
    %v1411 = vpop.f32.mrb[0].mxu0
    %1412 = vmatprep.mubr.f32.mxu0 0.0
    %1413 = vmatmul.mubr.f32.gmra.mrb[0].mxu0 %v1196
    %v1414 = vpop.f32.mrb[0].mxu0
    %v1415 = vadd.f32 0.0, %v1414
    %v1416 = vpop.f32.mrb[0].mxu0
    %1417 = vmatprep.mubr.f32.mxu0 0.0
    %1418 = vmatmul.mubr.f32.gmra.mrb[0].mxu0 %v1197
    %v1419 = vpop.f32.mrb[0].mxu0
    %v1420 = vadd.f32 0.0, %v1419
    %v1421 = vpop.f32.mrb[0].mxu0
    %1422 = vmatprep.mubr.f32.mxu0 0.0
    %1423 = vmatmul.mubr.f32.gmra.mrb[0].mxu0 %v1198
    %v1424 = vpop.f32.mrb[0].mxu0
    %v1425 = vadd.f32 0.0, %v1424
    %v1426 = vpop.f32.mrb[0].mxu0
    %1427 = vmatprep.mubr.f32.mxu0 0.0
    %1428 = vmatmul.mubr.f32.gmra.mrb[0].mxu0 %v1199
    %v1429 = vpop.f32.mrb[0].mxu0
    %v1430 = vadd.f32 0.0, %v1429
    %v1431 = vpop.f32.mrb[0].mxu0
    %1432 = vmatprep.mubr.f32.mxu0 0.0
    %1433 = vmatmul.mubr.f32.gmra.mrb[0].mxu0 %v1200
    %v1434 = vpop.f32.mrb[0].mxu0
    %v1435 = vadd.f32 0.0, %v1434
    %v1436 = vpop.f32.mrb[0].mxu0
    %1437 = vmatprep.mubr.f32.mxu0 0.0
    %1438 = vmatmul.mubr.f32.gmra.mrb[0].mxu0 %v1201
    %v1439 = vpop.f32.mrb[0].mxu0
    %v1440 = vadd.f32 0.0, %v1439
    %v1441 = vpop.f32.mrb[0].mxu0
    %1442 = vdwg.mxu0
    %s1443 = sadd.s32 0, 512
    %s1444 = scalar_lea.vmem [#allocation7], %s1443
    %1445 = vst [vmem:[%s1444] sm:$0xff] %v1285
    %1446 = vst [vmem:[%s1444 + $0x8] sm:$0xff] %v1290
    %1447 = vst [vmem:[%s1444 + $0x10] sm:$0xff] %v1295
    %1448 = vst [vmem:[%s1444 + $0x18] sm:$0xff] %v1300
    %1449 = vst [vmem:[%s1444 + $0x20] sm:$0xff] %v1305
    %1450 = vst [vmem:[%s1444 + $0x28] sm:$0xff] %v1310
    %1451 = vst [vmem:[%s1444 + $0x30] sm:$0xff] %v1315
    %1452 = vst [vmem:[%s1444 + $0x38] sm:$0xff] %v1320
    %1453 = vst [vmem:[%s1444 + $0x40] sm:$0xff] %v1325
    %1454 = vst [vmem:[%s1444 + $0x48] sm:$0xff] %v1330
    %1455 = vst [vmem:[%s1444 + $0x50] sm:$0xff] %v1335
    %1456 = vst [vmem:[%s1444 + $0x58] sm:$0xff] %v1340
    %1457 = vst [vmem:[%s1444 + $0x60] sm:$0xff] %v1345
    %1458 = vst [vmem:[%s1444 + $0x68] sm:$0xff] %v1350
    %1459 = vst [vmem:[%s1444 + $0x70] sm:$0xff] %v1355
    %1460 = vst [vmem:[%s1444 + $0x78] sm:$0xff] %v1360
    %1461 = vst [vmem:[%s1444 + $0x80] sm:$0xff] %v1365
    %1462 = vst [vmem:[%s1444 + $0x88] sm:$0xff] %v1370
    %1463 = vst [vmem:[%s1444 + $0x90] sm:$0xff] %v1375
    %1464 = vst [vmem:[%s1444 + $0x98] sm:$0xff] %v1380
    %1465 = vst [vmem:[%s1444 + $0xa0] sm:$0xff] %v1385
    %1466 = vst [vmem:[%s1444 + $0xa8] sm:$0xff] %v1390
    %1467 = vst [vmem:[%s1444 + $0xb0] sm:$0xff] %v1395
    %1468 = vst [vmem:[%s1444 + $0xb8] sm:$0xff] %v1400
    %1469 = vst [vmem:[%s1444 + $0xc0] sm:$0xff] %v1405
    %1470 = vst [vmem:[%s1444 + $0xc8] sm:$0xff] %v1410
    %1471 = vst [vmem:[%s1444 + $0xd0] sm:$0xff] %v1415
    %1472 = vst [vmem:[%s1444 + $0xd8] sm:$0xff] %v1420
    %1473 = vst [vmem:[%s1444 + $0xe0] sm:$0xff] %v1425
    %1474 = vst [vmem:[%s1444 + $0xe8] sm:$0xff] %v1430
    %1475 = vst [vmem:[%s1444 + $0xf0] sm:$0xff] %v1435
    %1476 = vst [vmem:[%s1444 + $0xf8] sm:$0xff] %v1440
    %1477 = vset.pattern.permute.xlu0 6
    %1478 = vperm.xlu0 %1477, %v62
    %v1479 = vpop.permute.xlu0 %1478
    %1480 = vset.pattern.permute.xlu0 6
    %1481 = vperm.xlu0 %1480, %v63
    %v1482 = vpop.permute.xlu0 %1481
    %1483 = vset.pattern.permute.xlu0 6
    %1484 = vperm.xlu0 %1483, %v64
    %v1485 = vpop.permute.xlu0 %1484
    %1486 = vset.pattern.permute.xlu0 6
    %1487 = vperm.xlu0 %1486, %v65
    %v1488 = vpop.permute.xlu0 %1487
    %1489 = vset.pattern.permute.xlu0 6
    %1490 = vperm.xlu0 %1489, %v66
    %v1491 = vpop.permute.xlu0 %1490
    %1492 = vset.pattern.permute.xlu0 6
    %1493 = vperm.xlu0 %1492, %v67
    %v1494 = vpop.permute.xlu0 %1493
    %1495 = vset.pattern.permute.xlu0 6
    %1496 = vperm.xlu0 %1495, %v68
    %v1497 = vpop.permute.xlu0 %1496
    %1498 = vset.pattern.permute.xlu0 6
    %1499 = vperm.xlu0 %1498, %v69
    %v1500 = vpop.permute.xlu0 %1499
    %1501 = vset.pattern.permute.xlu0 6
    %1502 = vperm.xlu0 %1501, %v70
    %v1503 = vpop.permute.xlu0 %1502
    %1504 = vset.pattern.permute.xlu0 6
    %1505 = vperm.xlu0 %1504, %v71
    %v1506 = vpop.permute.xlu0 %1505
    %1507 = vset.pattern.permute.xlu0 6
    %1508 = vperm.xlu0 %1507, %v72
    %v1509 = vpop.permute.xlu0 %1508
    %1510 = vset.pattern.permute.xlu0 6
    %1511 = vperm.xlu0 %1510, %v73
    %v1512 = vpop.permute.xlu0 %1511
    %1513 = vset.pattern.permute.xlu0 6
    %1514 = vperm.xlu0 %1513, %v74
    %v1515 = vpop.permute.xlu0 %1514
    %1516 = vset.pattern.permute.xlu0 6
    %1517 = vperm.xlu0 %1516, %v75
    %v1518 = vpop.permute.xlu0 %1517
    %1519 = vset.pattern.permute.xlu0 6
    %1520 = vperm.xlu0 %1519, %v76
    %v1521 = vpop.permute.xlu0 %1520
    %1522 = vset.pattern.permute.xlu0 6
    %1523 = vperm.xlu0 %1522, %v77
    %v1524 = vpop.permute.xlu0 %1523
    %vm1525 = vcmp.eq.s32.totalorder %v39, %v1479
    %vm1526 = vcmp.eq.s32.totalorder %v39, %v1482
    %vm1527 = vcmp.eq.s32.totalorder %v39, %v1485
    %vm1528 = vcmp.eq.s32.totalorder %v39, %v1488
    %vm1529 = vcmp.eq.s32.totalorder %v39, %v1491
    %vm1530 = vcmp.eq.s32.totalorder %v39, %v1494
    %vm1531 = vcmp.eq.s32.totalorder %v39, %v1497
    %vm1532 = vcmp.eq.s32.totalorder %v39, %v1500
    %vm1533 = vcmp.eq.s32.totalorder %v39, %v1503
    %vm1534 = vcmp.eq.s32.totalorder %v39, %v1506
    %vm1535 = vcmp.eq.s32.totalorder %v39, %v1509
    %vm1536 = vcmp.eq.s32.totalorder %v39, %v1512
    %vm1537 = vcmp.eq.s32.totalorder %v39, %v1515
    %vm1538 = vcmp.eq.s32.totalorder %v39, %v1518
    %vm1539 = vcmp.eq.s32.totalorder %v39, %v1521
    %vm1540 = vcmp.eq.s32.totalorder %v39, %v1524
    %v1541 = vsel %vm1525, 1, 0
    %v1542 = vsel %vm1526, 1, 0
    %v1543 = vsel %vm1527, 1, 0
    %v1544 = vsel %vm1528, 1, 0
    %v1545 = vsel %vm1529, 1, 0
    %v1546 = vsel %vm1530, 1, 0
    %v1547 = vsel %vm1531, 1, 0
    %v1548 = vsel %vm1532, 1, 0
    %v1549 = vsel %vm1533, 1, 0
    %v1550 = vsel %vm1534, 1, 0
    %v1551 = vsel %vm1535, 1, 0
    %v1552 = vsel %vm1536, 1, 0
    %v1553 = vsel %vm1537, 1, 0
    %v1554 = vsel %vm1538, 1, 0
    %v1555 = vsel %vm1539, 1, 0
    %v1556 = vsel %vm1540, 1, 0
    %v1557 = vcvt.s32.f32 %v1541
    %v1558 = vcvt.s32.f32 %v1542
    %v1559 = vcvt.s32.f32 %v1543
    %v1560 = vcvt.s32.f32 %v1544
    %v1561 = vcvt.s32.f32 %v1545
    %v1562 = vcvt.s32.f32 %v1546
    %v1563 = vcvt.s32.f32 %v1547
    %v1564 = vcvt.s32.f32 %v1548
    %v1565 = vcvt.s32.f32 %v1549
    %v1566 = vcvt.s32.f32 %v1550
    %v1567 = vcvt.s32.f32 %v1551
    %v1568 = vcvt.s32.f32 %v1552
    %v1569 = vcvt.s32.f32 %v1553
    %v1570 = vcvt.s32.f32 %v1554
    %v1571 = vcvt.s32.f32 %v1555
    %v1572 = vcvt.s32.f32 %v1556
    %1573 = vset.pattern.permute.xlu0 7
    %1574 = vperm.xlu0 %1573, %v62
    %v1575 = vpop.permute.xlu0 %1574
    %1576 = vset.pattern.permute.xlu0 7
    %1577 = vperm.xlu0 %1576, %v63
    %v1578 = vpop.permute.xlu0 %1577
    %1579 = vset.pattern.permute.xlu0 7
    %1580 = vperm.xlu0 %1579, %v64
    %v1581 = vpop.permute.xlu0 %1580
    %1582 = vset.pattern.permute.xlu0 7
    %1583 = vperm.xlu0 %1582, %v65
    %v1584 = vpop.permute.xlu0 %1583
    %1585 = vset.pattern.permute.xlu0 7
    %1586 = vperm.xlu0 %1585, %v66
    %v1587 = vpop.permute.xlu0 %1586
    %1588 = vset.pattern.permute.xlu0 7
    %1589 = vperm.xlu0 %1588, %v67
    %v1590 = vpop.permute.xlu0 %1589
    %1591 = vset.pattern.permute.xlu0 7
    %1592 = vperm.xlu0 %1591, %v68
    %v1593 = vpop.permute.xlu0 %1592
    %1594 = vset.pattern.permute.xlu0 7
    %1595 = vperm.xlu0 %1594, %v69
    %v1596 = vpop.permute.xlu0 %1595
    %1597 = vset.pattern.permute.xlu0 7
    %1598 = vperm.xlu0 %1597, %v70
    %v1599 = vpop.permute.xlu0 %1598
    %1600 = vset.pattern.permute.xlu0 7
    %1601 = vperm.xlu0 %1600, %v71
    %v1602 = vpop.permute.xlu0 %1601
    %1603 = vset.pattern.permute.xlu0 7
    %1604 = vperm.xlu0 %1603, %v72
    %v1605 = vpop.permute.xlu0 %1604
    %1606 = vset.pattern.permute.xlu0 7
    %1607 = vperm.xlu0 %1606, %v73
    %v1608 = vpop.permute.xlu0 %1607
    %1609 = vset.pattern.permute.xlu0 7
    %1610 = vperm.xlu0 %1609, %v74
    %v1611 = vpop.permute.xlu0 %1610
    %1612 = vset.pattern.permute.xlu0 7
    %1613 = vperm.xlu0 %1612, %v75
    %v1614 = vpop.permute.xlu0 %1613
    %1615 = vset.pattern.permute.xlu0 7
    %1616 = vperm.xlu0 %1615, %v76
    %v1617 = vpop.permute.xlu0 %1616
    %1618 = vset.pattern.permute.xlu0 7
    %1619 = vperm.xlu0 %1618, %v77
    %v1620 = vpop.permute.xlu0 %1619
    %vm1621 = vcmp.eq.s32.totalorder %v39, %v1575
    %vm1622 = vcmp.eq.s32.totalorder %v39, %v1578
    %vm1623 = vcmp.eq.s32.totalorder %v39, %v1581
    %vm1624 = vcmp.eq.s32.totalorder %v39, %v1584
    %vm1625 = vcmp.eq.s32.totalorder %v39, %v1587
    %vm1626 = vcmp.eq.s32.totalorder %v39, %v1590
    %vm1627 = vcmp.eq.s32.totalorder %v39, %v1593
    %vm1628 = vcmp.eq.s32.totalorder %v39, %v1596
    %vm1629 = vcmp.eq.s32.totalorder %v39, %v1599
    %vm1630 = vcmp.eq.s32.totalorder %v39, %v1602
    %vm1631 = vcmp.eq.s32.totalorder %v39, %v1605
    %vm1632 = vcmp.eq.s32.totalorder %v39, %v1608
    %vm1633 = vcmp.eq.s32.totalorder %v39, %v1611
    %vm1634 = vcmp.eq.s32.totalorder %v39, %v1614
    %vm1635 = vcmp.eq.s32.totalorder %v39, %v1617
    %vm1636 = vcmp.eq.s32.totalorder %v39, %v1620
    %v1637 = vsel %vm1621, 1, 0
    %v1638 = vsel %vm1622, 1, 0
    %v1639 = vsel %vm1623, 1, 0
    %v1640 = vsel %vm1624, 1, 0
    %v1641 = vsel %vm1625, 1, 0
    %v1642 = vsel %vm1626, 1, 0
    %v1643 = vsel %vm1627, 1, 0
    %v1644 = vsel %vm1628, 1, 0
    %v1645 = vsel %vm1629, 1, 0
    %v1646 = vsel %vm1630, 1, 0
    %v1647 = vsel %vm1631, 1, 0
    %v1648 = vsel %vm1632, 1, 0
    %v1649 = vsel %vm1633, 1, 0
    %v1650 = vsel %vm1634, 1, 0
    %v1651 = vsel %vm1635, 1, 0
    %v1652 = vsel %vm1636, 1, 0
    %v1653 = vcvt.s32.f32 %v1637
    %v1654 = vcvt.s32.f32 %v1638
    %v1655 = vcvt.s32.f32 %v1639
    %v1656 = vcvt.s32.f32 %v1640
    %v1657 = vcvt.s32.f32 %v1641
    %v1658 = vcvt.s32.f32 %v1642
    %v1659 = vcvt.s32.f32 %v1643
    %v1660 = vcvt.s32.f32 %v1644
    %v1661 = vcvt.s32.f32 %v1645
    %v1662 = vcvt.s32.f32 %v1646
    %v1663 = vcvt.s32.f32 %v1647
    %v1664 = vcvt.s32.f32 %v1648
    %v1665 = vcvt.s32.f32 %v1649
    %v1666 = vcvt.s32.f32 %v1650
    %v1667 = vcvt.s32.f32 %v1651
    %v1668 = vcvt.s32.f32 %v1652
    %v1669 = vld [vmem:[#allocation5] sm:$0xff]
    %v1670 = vld [vmem:[#allocation5 + $0x8] sm:$0xff]
    %v1671 = vld [vmem:[#allocation5 + $0x10] sm:$0xff]
    %v1672 = vld [vmem:[#allocation5 + $0x18] sm:$0xff]
    %v1673 = vld [vmem:[#allocation5 + $0x20] sm:$0xff]
    %v1674 = vld [vmem:[#allocation5 + $0x28] sm:$0xff]
    %v1675 = vld [vmem:[#allocation5 + $0x30] sm:$0xff]
    %v1676 = vld [vmem:[#allocation5 + $0x38] sm:$0xff]
    %v1677 = vld [vmem:[#allocation5 + $0x40] sm:$0xff]
    %v1678 = vld [vmem:[#allocation5 + $0x48] sm:$0xff]
    %v1679 = vld [vmem:[#allocation5 + $0x50] sm:$0xff]
    %v1680 = vld [vmem:[#allocation5 + $0x58] sm:$0xff]
    %v1681 = vld [vmem:[#allocation5 + $0x60] sm:$0xff]
    %v1682 = vld [vmem:[#allocation5 + $0x68] sm:$0xff]
    %v1683 = vld [vmem:[#allocation5 + $0x70] sm:$0xff]
    %v1684 = vld [vmem:[#allocation5 + $0x78] sm:$0xff]
    %1685 = vmatprep.subr.mxu0 0.0
    %1686 = vmatpush1.msra.mxu0 %v1669
    %1687 = vmatprep.subr.mxu0 0.0
    %1688 = vmatpush1.msra.mxu0 %v1670
    %1689 = vmatprep.subr.mxu0 0.0
    %1690 = vmatpush1.msra.mxu0 %v1671
    %1691 = vmatprep.subr.mxu0 0.0
    %1692 = vmatpush1.msra.mxu0 %v1672
    %1693 = vmatprep.subr.mxu0 0.0
    %1694 = vmatpush1.msra.mxu0 %v1673
    %1695 = vmatprep.subr.mxu0 0.0
    %1696 = vmatpush1.msra.mxu0 %v1674
    %1697 = vmatprep.subr.mxu0 0.0
    %1698 = vmatpush1.msra.mxu0 %v1675
    %1699 = vmatprep.subr.mxu0 0.0
    %1700 = vmatpush1.msra.mxu0 %v1676
    %1701 = vmatprep.subr.mxu0 0.0
    %1702 = vmatpush1.msra.mxu0 %v1677
    %1703 = vmatprep.subr.mxu0 0.0
    %1704 = vmatpush1.msra.mxu0 %v1678
    %1705 = vmatprep.subr.mxu0 0.0
    %1706 = vmatpush1.msra.mxu0 %v1679
    %1707 = vmatprep.subr.mxu0 0.0
    %1708 = vmatpush1.msra.mxu0 %v1680
    %1709 = vmatprep.subr.mxu0 0.0
    %1710 = vmatpush1.msra.mxu0 %v1681
    %1711 = vmatprep.subr.mxu0 0.0
    %1712 = vmatpush1.msra.mxu0 %v1682
    %1713 = vmatprep.subr.mxu0 0.0
    %1714 = vmatpush1.msra.mxu0 %v1683
    %1715 = vmatprep.subr.mxu0 0.0
    %1716 = vmatpush1.msra.mxu0 %v1684
    %1717 = vmatprep.subr.mxu0 0.0
    %1718 = vmatpush1.msra.mxu0 0.0
    %1719 = vmatprep.subr.mxu0 0.0
    %1720 = vmatpush1.msra.mxu0 0.0
    %1721 = vmatprep.subr.mxu0 0.0
    %1722 = vmatpush1.msra.mxu0 0.0
    %1723 = vmatprep.subr.mxu0 0.0
    %1724 = vmatpush1.msra.mxu0 0.0
    %1725 = vmatprep.subr.mxu0 0.0
    %1726 = vmatpush1.msra.mxu0 0.0
    %1727 = vmatprep.subr.mxu0 0.0
    %1728 = vmatpush1.msra.mxu0 0.0
    %1729 = vmatprep.subr.mxu0 0.0
    %1730 = vmatpush1.msra.mxu0 0.0
    %1731 = vmatprep.subr.mxu0 0.0
    %1732 = vmatpush1.msra.mxu0 0.0
    %1733 = vmatprep.subr.mxu0 0.0
    %1734 = vmatpush1.msra.mxu0 0.0
    %1735 = vmatprep.subr.mxu0 0.0
    %1736 = vmatpush1.msra.mxu0 0.0
    %1737 = vmatprep.subr.mxu0 0.0
    %1738 = vmatpush1.msra.mxu0 0.0
    %1739 = vmatprep.subr.mxu0 0.0
    %1740 = vmatpush1.msra.mxu0 0.0
    %1741 = vmatprep.subr.mxu0 0.0
    %1742 = vmatpush1.msra.mxu0 0.0
    %1743 = vmatprep.subr.mxu0 0.0
    %1744 = vmatpush1.msra.mxu0 0.0
    %1745 = vmatprep.subr.mxu0 0.0
    %1746 = vmatpush1.msra.mxu0 0.0
    %1747 = vmatprep.subr.mxu0 0.0
    %1748 = vmatpush1.msra.mxu0 0.0
    %1749 = vmatprep.mubr.f32.mxu0 0.0
    %1750 = vmatmul.mubr.f32.gmra.mrb[0].mxu0 %v1557
    %v1751 = vpop.f32.mrb[0].mxu0
    %v1752 = vadd.f32 0.0, %v1751
    %v1753 = vpop.f32.mrb[0].mxu0
    %1754 = vmatprep.mubr.f32.mxu0 0.0
    %1755 = vmatmul.mubr.f32.gmra.mrb[0].mxu0 %v1558
    %v1756 = vpop.f32.mrb[0].mxu0
    %v1757 = vadd.f32 0.0, %v1756
    %v1758 = vpop.f32.mrb[0].mxu0
    %1759 = vmatprep.mubr.f32.mxu0 0.0
    %1760 = vmatmul.mubr.f32.gmra.mrb[0].mxu0 %v1559
    %v1761 = vpop.f32.mrb[0].mxu0
    %v1762 = vadd.f32 0.0, %v1761
    %v1763 = vpop.f32.mrb[0].mxu0
    %1764 = vmatprep.mubr.f32.mxu0 0.0
    %1765 = vmatmul.mubr.f32.gmra.mrb[0].mxu0 %v1560
    %v1766 = vpop.f32.mrb[0].mxu0
    %v1767 = vadd.f32 0.0, %v1766
    %v1768 = vpop.f32.mrb[0].mxu0
    %1769 = vmatprep.mubr.f32.mxu0 0.0
    %1770 = vmatmul.mubr.f32.gmra.mrb[0].mxu0 %v1561
    %v1771 = vpop.f32.mrb[0].mxu0
    %v1772 = vadd.f32 0.0, %v1771
    %v1773 = vpop.f32.mrb[0].mxu0
    %1774 = vmatprep.mubr.f32.mxu0 0.0
    %1775 = vmatmul.mubr.f32.gmra.mrb[0].mxu0 %v1562
    %v1776 = vpop.f32.mrb[0].mxu0
    %v1777 = vadd.f32 0.0, %v1776
    %v1778 = vpop.f32.mrb[0].mxu0
    %1779 = vmatprep.mubr.f32.mxu0 0.0
    %1780 = vmatmul.mubr.f32.gmra.mrb[0].mxu0 %v1563
    %v1781 = vpop.f32.mrb[0].mxu0
    %v1782 = vadd.f32 0.0, %v1781
    %v1783 = vpop.f32.mrb[0].mxu0
    %1784 = vmatprep.mubr.f32.mxu0 0.0
    %1785 = vmatmul.mubr.f32.gmra.mrb[0].mxu0 %v1564
    %v1786 = vpop.f32.mrb[0].mxu0
    %v1787 = vadd.f32 0.0, %v1786
    %v1788 = vpop.f32.mrb[0].mxu0
    %1789 = vmatprep.mubr.f32.mxu0 0.0
    %1790 = vmatmul.mubr.f32.gmra.mrb[0].mxu0 %v1565
    %v1791 = vpop.f32.mrb[0].mxu0
    %v1792 = vadd.f32 0.0, %v1791
    %v1793 = vpop.f32.mrb[0].mxu0
    %1794 = vmatprep.mubr.f32.mxu0 0.0
    %1795 = vmatmul.mubr.f32.gmra.mrb[0].mxu0 %v1566
    %v1796 = vpop.f32.mrb[0].mxu0
    %v1797 = vadd.f32 0.0, %v1796
    %v1798 = vpop.f32.mrb[0].mxu0
    %1799 = vmatprep.mubr.f32.mxu0 0.0
    %1800 = vmatmul.mubr.f32.gmra.mrb[0].mxu0 %v1567
    %v1801 = vpop.f32.mrb[0].mxu0
    %v1802 = vadd.f32 0.0, %v1801
    %v1803 = vpop.f32.mrb[0].mxu0
    %1804 = vmatprep.mubr.f32.mxu0 0.0
    %1805 = vmatmul.mubr.f32.gmra.mrb[0].mxu0 %v1568
    %v1806 = vpop.f32.mrb[0].mxu0
    %v1807 = vadd.f32 0.0, %v1806
    %v1808 = vpop.f32.mrb[0].mxu0
    %1809 = vmatprep.mubr.f32.mxu0 0.0
    %1810 = vmatmul.mubr.f32.gmra.mrb[0].mxu0 %v1569
    %v1811 = vpop.f32.mrb[0].mxu0
    %v1812 = vadd.f32 0.0, %v1811
    %v1813 = vpop.f32.mrb[0].mxu0
    %1814 = vmatprep.mubr.f32.mxu0 0.0
    %1815 = vmatmul.mubr.f32.gmra.mrb[0].mxu0 %v1570
    %v1816 = vpop.f32.mrb[0].mxu0
    %v1817 = vadd.f32 0.0, %v1816
    %v1818 = vpop.f32.mrb[0].mxu0
    %1819 = vmatprep.mubr.f32.mxu0 0.0
    %1820 = vmatmul.mubr.f32.gmra.mrb[0].mxu0 %v1571
    %v1821 = vpop.f32.mrb[0].mxu0
    %v1822 = vadd.f32 0.0, %v1821
    %v1823 = vpop.f32.mrb[0].mxu0
    %1824 = vmatprep.mubr.f32.mxu0 0.0
    %1825 = vmatmul.mubr.f32.gmra.mrb[0].mxu0 %v1572
    %v1826 = vpop.f32.mrb[0].mxu0
    %v1827 = vadd.f32 0.0, %v1826
    %v1828 = vpop.f32.mrb[0].mxu0
    %1829 = vmatprep.mubr.f32.mxu0 0.0
    %1830 = vmatmul.mubr.f32.gmra.mrb[0].mxu0 %v1653
    %v1831 = vpop.f32.mrb[0].mxu0
    %v1832 = vadd.f32 0.0, %v1831
    %v1833 = vpop.f32.mrb[0].mxu0
    %1834 = vmatprep.mubr.f32.mxu0 0.0
    %1835 = vmatmul.mubr.f32.gmra.mrb[0].mxu0 %v1654
    %v1836 = vpop.f32.mrb[0].mxu0
    %v1837 = vadd.f32 0.0, %v1836
    %v1838 = vpop.f32.mrb[0].mxu0
    %1839 = vmatprep.mubr.f32.mxu0 0.0
    %1840 = vmatmul.mubr.f32.gmra.mrb[0].mxu0 %v1655
    %v1841 = vpop.f32.mrb[0].mxu0
    %v1842 = vadd.f32 0.0, %v1841
    %v1843 = vpop.f32.mrb[0].mxu0
    %1844 = vmatprep.mubr.f32.mxu0 0.0
    %1845 = vmatmul.mubr.f32.gmra.mrb[0].mxu0 %v1656
    %v1846 = vpop.f32.mrb[0].mxu0
    %v1847 = vadd.f32 0.0, %v1846
    %v1848 = vpop.f32.mrb[0].mxu0
    %1849 = vmatprep.mubr.f32.mxu0 0.0
    %1850 = vmatmul.mubr.f32.gmra.mrb[0].mxu0 %v1657
    %v1851 = vpop.f32.mrb[0].mxu0
    %v1852 = vadd.f32 0.0, %v1851
    %v1853 = vpop.f32.mrb[0].mxu0
    %1854 = vmatprep.mubr.f32.mxu0 0.0
    %1855 = vmatmul.mubr.f32.gmra.mrb[0].mxu0 %v1658
    %v1856 = vpop.f32.mrb[0].mxu0
    %v1857 = vadd.f32 0.0, %v1856
    %v1858 = vpop.f32.mrb[0].mxu0
    %1859 = vmatprep.mubr.f32.mxu0 0.0
    %1860 = vmatmul.mubr.f32.gmra.mrb[0].mxu0 %v1659
    %v1861 = vpop.f32.mrb[0].mxu0
    %v1862 = vadd.f32 0.0, %v1861
    %v1863 = vpop.f32.mrb[0].mxu0
    %1864 = vmatprep.mubr.f32.mxu0 0.0
    %1865 = vmatmul.mubr.f32.gmra.mrb[0].mxu0 %v1660
    %v1866 = vpop.f32.mrb[0].mxu0
    %v1867 = vadd.f32 0.0, %v1866
    %v1868 = vpop.f32.mrb[0].mxu0
    %1869 = vmatprep.mubr.f32.mxu0 0.0
    %1870 = vmatmul.mubr.f32.gmra.mrb[0].mxu0 %v1661
    %v1871 = vpop.f32.mrb[0].mxu0
    %v1872 = vadd.f32 0.0, %v1871
    %v1873 = vpop.f32.mrb[0].mxu0
    %1874 = vmatprep.mubr.f32.mxu0 0.0
    %1875 = vmatmul.mubr.f32.gmra.mrb[0].mxu0 %v1662
    %v1876 = vpop.f32.mrb[0].mxu0
    %v1877 = vadd.f32 0.0, %v1876
    %v1878 = vpop.f32.mrb[0].mxu0
    %1879 = vmatprep.mubr.f32.mxu0 0.0
    %1880 = vmatmul.mubr.f32.gmra.mrb[0].mxu0 %v1663
    %v1881 = vpop.f32.mrb[0].mxu0
    %v1882 = vadd.f32 0.0, %v1881
    %v1883 = vpop.f32.mrb[0].mxu0
    %1884 = vmatprep.mubr.f32.mxu0 0.0
    %1885 = vmatmul.mubr.f32.gmra.mrb[0].mxu0 %v1664
    %v1886 = vpop.f32.mrb[0].mxu0
    %v1887 = vadd.f32 0.0, %v1886
    %v1888 = vpop.f32.mrb[0].mxu0
    %1889 = vmatprep.mubr.f32.mxu0 0.0
    %1890 = vmatmul.mubr.f32.gmra.mrb[0].mxu0 %v1665
    %v1891 = vpop.f32.mrb[0].mxu0
    %v1892 = vadd.f32 0.0, %v1891
    %v1893 = vpop.f32.mrb[0].mxu0
    %1894 = vmatprep.mubr.f32.mxu0 0.0
    %1895 = vmatmul.mubr.f32.gmra.mrb[0].mxu0 %v1666
    %v1896 = vpop.f32.mrb[0].mxu0
    %v1897 = vadd.f32 0.0, %v1896
    %v1898 = vpop.f32.mrb[0].mxu0
    %1899 = vmatprep.mubr.f32.mxu0 0.0
    %1900 = vmatmul.mubr.f32.gmra.mrb[0].mxu0 %v1667
    %v1901 = vpop.f32.mrb[0].mxu0
    %v1902 = vadd.f32 0.0, %v1901
    %v1903 = vpop.f32.mrb[0].mxu0
    %1904 = vmatprep.mubr.f32.mxu0 0.0
    %1905 = vmatmul.mubr.f32.gmra.mrb[0].mxu0 %v1668
    %v1906 = vpop.f32.mrb[0].mxu0
    %v1907 = vadd.f32 0.0, %v1906
    %v1908 = vpop.f32.mrb[0].mxu0
    %1909 = vdwg.mxu0
    %s1910 = sadd.s32 0, 768
    %s1911 = scalar_lea.vmem [#allocation7], %s1910
    %1912 = vst [vmem:[%s1911] sm:$0xff] %v1752
    %1913 = vst [vmem:[%s1911 + $0x8] sm:$0xff] %v1757
    %1914 = vst [vmem:[%s1911 + $0x10] sm:$0xff] %v1762
    %1915 = vst [vmem:[%s1911 + $0x18] sm:$0xff] %v1767
    %1916 = vst [vmem:[%s1911 + $0x20] sm:$0xff] %v1772
    %1917 = vst [vmem:[%s1911 + $0x28] sm:$0xff] %v1777
    %1918 = vst [vmem:[%s1911 + $0x30] sm:$0xff] %v1782
    %1919 = vst [vmem:[%s1911 + $0x38] sm:$0xff] %v1787
    %1920 = vst [vmem:[%s1911 + $0x40] sm:$0xff] %v1792
    %1921 = vst [vmem:[%s1911 + $0x48] sm:$0xff] %v1797
    %1922 = vst [vmem:[%s1911 + $0x50] sm:$0xff] %v1802
    %1923 = vst [vmem:[%s1911 + $0x58] sm:$0xff] %v1807
    %1924 = vst [vmem:[%s1911 + $0x60] sm:$0xff] %v1812
    %1925 = vst [vmem:[%s1911 + $0x68] sm:$0xff] %v1817
    %1926 = vst [vmem:[%s1911 + $0x70] sm:$0xff] %v1822
    %1927 = vst [vmem:[%s1911 + $0x78] sm:$0xff] %v1827
    %1928 = vst [vmem:[%s1911 + $0x80] sm:$0xff] %v1832
    %1929 = vst [vmem:[%s1911 + $0x88] sm:$0xff] %v1837
    %1930 = vst [vmem:[%s1911 + $0x90] sm:$0xff] %v1842
    %1931 = vst [vmem:[%s1911 + $0x98] sm:$0xff] %v1847
    %1932 = vst [vmem:[%s1911 + $0xa0] sm:$0xff] %v1852
    %1933 = vst [vmem:[%s1911 + $0xa8] sm:$0xff] %v1857
    %1934 = vst [vmem:[%s1911 + $0xb0] sm:$0xff] %v1862
    %1935 = vst [vmem:[%s1911 + $0xb8] sm:$0xff] %v1867
    %1936 = vst [vmem:[%s1911 + $0xc0] sm:$0xff] %v1872
    %1937 = vst [vmem:[%s1911 + $0xc8] sm:$0xff] %v1877
    %1938 = vst [vmem:[%s1911 + $0xd0] sm:$0xff] %v1882
    %1939 = vst [vmem:[%s1911 + $0xd8] sm:$0xff] %v1887
    %1940 = vst [vmem:[%s1911 + $0xe0] sm:$0xff] %v1892
    %1941 = vst [vmem:[%s1911 + $0xe8] sm:$0xff] %v1897
    %1942 = vst [vmem:[%s1911 + $0xf0] sm:$0xff] %v1902
    %1943 = vst [vmem:[%s1911 + $0xf8] sm:$0xff] %v1907
    // Predicated region
    $region18: #{tpu_custom_call.1} parent=1 // pred_check
      _
    $region19: #{tpu_custom_call.1} parent=1 // pred_check_branch
      %1945 = sbr.rel (0) target = $region21
    $region20: #{tpu_custom_call.1} parent=1 // pred_region
      %s1947 = ssub.s32 16384, 8192
      %1948 = vsyncadd [#allocation4], %s1947
      %s1949 = sshll.u32 [#allocation7], 4
      %s1950 = int_to_ptr.vmem [resolvable:$true] %s1949
      %1955 = dma.vmem_to_hbm [thread:$0]  %s1950, 8192, %s2, [#allocation4], 128, 128, 8
    $region21: #{tpu_custom_call.1} parent=1 // pred_fallthru
      _
    // Predicated region
    $region22: #{tpu_custom_call.1} parent=1 // pred_check
      _
    $region23: #{tpu_custom_call.1} parent=1 // pred_check_branch
      %1957 = sbr.rel (0) target = $region25
    $region24: #{tpu_custom_call.1} parent=1 // pred_region
      %1958 = dma.done [#allocation4], 16384
    $region25: #{tpu_custom_call.1} parent=1 // pred_fallthru
      _
    %1959 = vsyncpa [#allocation3], 1
    %1960 = vsyncpa [#allocation6], 1
    %1961 = vsyncpa [#allocation4], 1

</llo_original>
